<compile_context>
chip_gen: v7x
topology: tpu7x:2x2x1
jax: 0.10.0
libtpu: 0.0.40
codegen_flags: <defaults>
</compile_context>

<pallas_src>
import functools

import jax
import jax.numpy as jnp
from jax.experimental import pallas as pl
from jax.experimental.pallas import tpu as pltpu

KSIZE = 5                  # conv_kernel_size
PAD = (KSIZE - 1) // 2     # 'same' padding
BN_EPS = 1e-5


def encoder_kernel(x_ref, *rest, num_layers, rows, seq_len):
    """(Conv1d k=5 'same', no bias -> folded BN -> ReLU) x num_layers.

    x_ref:   (M, E)             f32  embedded tokens, M = bblk * T
                                      (rows stacked batch-row-major: r = b*T + t)
    w_refs:  L x (K, Cin, Cout) bf16 conv weights, tap-major
    sc_ref:  (L, 1, Cout)       f32  gamma / sqrt(running_var + eps)
    bi_ref:  (L, 1, Cout)       f32  beta - running_mean * scale
    o_ref:   (M, Cout)          f32  output
    """
    w_refs = rest[:num_layers]
    sc_ref, bi_ref, o_ref = rest[num_layers:]
    M, T = rows, seq_len

    # Per-tap validity masks, computed once and shared across layers: row r
    # holds token t = r mod T of its batch row; tap offset d contributes iff
    # t + d stays inside [0, T).  The same mask zeroes both the zero-padding
    # halo at sequence edges and the cross-batch-row wraparound from the roll.
    t_idx = jax.lax.broadcasted_iota(jnp.int32, (M, 1), 0) % T
    masks = {}
    for d in range(-PAD, PAD + 1):
        if d > 0:
            masks[d] = t_idx < (T - d)
        elif d < 0:
            masks[d] = t_idx >= (-d)

    act = x_ref[...]                                        # (M, Cin) f32
    for l in range(num_layers):
        acc = None
        for k in range(KSIZE):
            d = k - PAD                                     # tap offset in [-2, 2]
            if d == 0:
                xk = act
            else:
                # out[r] = act[r + d] : XLU sublane rotate + boundary mask.
                xk = pltpu.roll(act, shift=(-d) % M, axis=0)
                xk = jnp.where(masks[d], xk, 0.0)
            part = jnp.dot(xk.astype(jnp.bfloat16), w_refs[l][k],
                           preferred_element_type=jnp.float32)
            acc = part if acc is None else acc + part
        y = jnp.maximum(acc * sc_ref[l] + bi_ref[l], 0.0)   # folded BN + ReLU
        if l == num_layers - 1:
            o_ref[...] = y.astype(o_ref.dtype)
        else:
            act = y                                         # keep f32 in VMEM
    # Dropout(0.5) is identity in eval mode — nothing to emit.


def encoder_forward(params, seqs):
    """seqs: (B, T) int32 token ids -> (B, T, conv_channels) f32."""
    B, T = seqs.shape
    embed = params["embed"]                       # (V, E) f32, row 0 == 0
    V, E = embed.shape
    convs = params["convs"]
    L = len(convs)
    w_list = [c["w3d"] for c in convs]            # (K, Cin_l, C) bf16 each
    C = w_list[0].shape[-1]

    sc = jnp.stack([c["scale"] for c in convs]).reshape(L, 1, C).astype(jnp.float32)
    bi = jnp.stack([c["bias"] for c in convs]).reshape(L, 1, C).astype(jnp.float32)

    # Embedding lookup as a plain gather outside the kernel (padding_idx row of
    # the table is zero, so no extra masking is needed).
    x = jnp.take(embed, seqs.reshape(B * T).astype(jnp.int32), axis=0)  # (B*T, E)

    # Single grid step by default: v5e/v6e have one TensorCore, so a serial
    # grid only adds per-step overhead and halves matmul M.  Split 2-way
    # ('parallel' -> v7x megacore) only when each half keeps the MXU busy.
    bblk, nblocks = B, 1
    if B % 2 == 0 and (B // 2) * T >= 512 and ((B // 2) * T) % 8 == 0:
        bblk, nblocks = B // 2, 2
    M = bblk * T
    assert nblocks == 1 or (M % 8 == 0 and E % 128 == 0 and C % 128 == 0), (
        "row block must satisfy the (8, 128) BlockSpec constraint when split")

    in_specs = [pl.BlockSpec((M, E), lambda i: (i, 0))]            # activations
    for w in w_list:
        k_, ci, co = w.shape
        in_specs.append(pl.BlockSpec((k_, ci, co), lambda i: (0, 0, 0)))
    in_specs += [
        pl.BlockSpec((L, 1, C), lambda i: (0, 0, 0)),              # BN scale
        pl.BlockSpec((L, 1, C), lambda i: (0, 0, 0)),              # BN bias
    ]

    kern = functools.partial(encoder_kernel, num_layers=L, rows=M, seq_len=T)

    cins = [int(w.shape[1]) for w in w_list]
    flops = 2 * B * T * sum(KSIZE * cin * C for cin in cins)
    bytes_accessed = (x.size * 4 + sum(int(w.size) for w in w_list) * 2
                      + 2 * L * C * 4 + B * T * C * 4)

    # NOTE: at production sizes (e.g. C=512, large B*T) also set
    # pltpu.CompilerParams(vmem_limit_bytes=...) from the resident weights +
    # activation block so the tiling still fits v7x's 64 MiB VMEM; at these
    # shapes the default scoped limit is ample.
    out2d = pl.pallas_call(
        kern,
        out_shape=jax.ShapeDtypeStruct((B * T, C), jnp.float32),
        grid_spec=pltpu.PrefetchScalarGridSpec(
            num_scalar_prefetch=0,
            grid=(nblocks,),
            in_specs=in_specs,
            out_specs=pl.BlockSpec((M, C), lambda i: (i, 0)),
        ),
        compiler_params=pltpu.CompilerParams(
            dimension_semantics=("parallel",)),
        cost_estimate=pl.CostEstimate(flops=flops, transcendentals=0,
                                      bytes_accessed=bytes_accessed),
    )(x, *w_list, sc, bi)
    return out2d.reshape(B, T, C)


def init_encoder_params(key, num_vocab=40, embed_dim=128, conv_layers=3,
                        conv_channels=128):
    """Deterministic synthetic parameters matching the module's shapes."""
    keys = jax.random.split(key, 1 + 5 * conv_layers)
    embed = 0.1 * jax.random.normal(keys[0], (num_vocab, embed_dim), jnp.float32)
    embed = embed.at[0].set(0.0)                 # padding_idx=0

    convs = []
    for layer in range(conv_layers):
        cin = embed_dim if layer == 0 else conv_channels
        cout = conv_channels
        kw = keys[1 + 5 * layer: 1 + 5 * (layer + 1)]
        # PyTorch Conv1d weight (Cout, Cin, K) stored tap-major as (K, Cin, Cout).
        w = jax.random.normal(kw[0], (KSIZE, cin, cout), jnp.float32)
        w = w * (1.0 / jnp.sqrt(cin * KSIZE))
        gamma = 1.0 + 0.1 * jax.random.normal(kw[1], (cout,), jnp.float32)
        beta = 0.1 * jax.random.normal(kw[2], (cout,), jnp.float32)
        running_mean = 0.1 * jax.random.normal(kw[3], (cout,), jnp.float32)
        running_var = jnp.abs(1.0 + 0.1 * jax.random.normal(kw[4], (cout,),
                                                            jnp.float32))
        # Fold eval-mode BatchNorm into per-channel scale/bias (f32).
        scale = gamma / jnp.sqrt(running_var + BN_EPS)
        bias = beta - running_mean * scale
        convs.append({"w3d": w.astype(jnp.bfloat16),
                      "scale": scale, "bias": bias})

    # TODO(synk): self.blstm parameters exist in Encoder.__init__ but the
    # inherited forward(seqs) never reaches them; intentionally not built.
    return {"embed": embed, "convs": convs}


if __name__ == "__main__":
    key = jax.random.PRNGKey(0)
    pkey, skey = jax.random.split(key)

    # Small, module-consistent shapes: batch=2, seq=16, vocab=40, channels=128.
    B, T = 2, 16
    NUM_VOCAB, EMBED_DIM, CONV_CH = 40, 128, 128

    params = init_encoder_params(pkey, num_vocab=NUM_VOCAB,
                                 embed_dim=EMBED_DIM, conv_layers=3,
                                 conv_channels=CONV_CH)
    seqs = jax.random.randint(skey, (B, T), 0, NUM_VOCAB, dtype=jnp.int32)

    out = encoder_forward(params, seqs)
    out = jax.block_until_ready(out)
    assert out.shape == (B, T, CONV_CH), out.shape
    print("KERNEL_OK")
</pallas_src>

<mosaic_0001>
module attributes {stable_mosaic.version = 11 : i64} {
  func.func @encoder_kernel(%arg0: i32, %arg1: memref<32x128xf32, #tpu.memory_space<vmem>>, %arg2: memref<5x128x128xbf16, #tpu.memory_space<vmem>>, %arg3: memref<5x128x128xbf16, #tpu.memory_space<vmem>>, %arg4: memref<5x128x128xbf16, #tpu.memory_space<vmem>>, %arg5: memref<3x1x128xf32, #tpu.memory_space<vmem>>, %arg6: memref<3x1x128xf32, #tpu.memory_space<vmem>>, %arg7: memref<32x128xf32, #tpu.memory_space<vmem>>) attributes {dimension_semantics = [#tpu.dimension_semantics<parallel>], iteration_bounds = array<i64: 1>, scalar_prefetch = 0 : i64, scratch_operands = 0 : i64, tpu.core_type = #tpu.core_type<tc>, window_params = [{transform_indices = @transform_0, window_bounds = array<i64: 32, 128>}, {pipeline_mode = #tpu.pipeline_mode<synchronous>, transform_indices = @transform_1, window_bounds = array<i64: 5, 128, 128>}, {pipeline_mode = #tpu.pipeline_mode<synchronous>, transform_indices = @transform_2, window_bounds = array<i64: 5, 128, 128>}, {pipeline_mode = #tpu.pipeline_mode<synchronous>, transform_indices = @transform_3, window_bounds = array<i64: 5, 128, 128>}, {pipeline_mode = #tpu.pipeline_mode<synchronous>, transform_indices = @transform_4, window_bounds = array<i64: 3, 1, 128>}, {pipeline_mode = #tpu.pipeline_mode<synchronous>, transform_indices = @transform_5, window_bounds = array<i64: 3, 1, 128>}, {transform_indices = @transform_6, window_bounds = array<i64: 32, 128>}]} {
    %0 = tpu.iota {dimensions = array<i32: 0>} : vector<32x1xi32>
    %c16_i32 = arith.constant 16 : i32
    %c0_i32 = arith.constant 0 : i32
    %1 = arith.cmpi eq, %c16_i32, %c0_i32 : i32
    %c1_i32 = arith.constant 1 : i32
    %2 = arith.select %1, %c1_i32, %c16_i32 : i32
    %3 = vector.broadcast %2 : i32 to vector<32x1xi32>
    %4 = arith.remsi %0, %3 : vector<32x1xi32>
    %c0_i32_0 = arith.constant 0 : i32
    %5 = vector.broadcast %c0_i32_0 : i32 to vector<32x1xi32>
    %6 = arith.cmpi ne, %4, %5 : vector<32x1xi32>
    %c0_i32_1 = arith.constant 0 : i32
    %7 = vector.broadcast %c0_i32_1 : i32 to vector<32x1xi32>
    %8 = arith.cmpi slt, %4, %7 : vector<32x1xi32>
    %c0_i32_2 = arith.constant 0 : i32
    %9 = arith.cmpi slt, %2, %c0_i32_2 : i32
    %10 = vector.broadcast %9 : i1 to vector<32x1xi1>
    %11 = vector.broadcast %10 : vector<32x1xi1> to vector<32x1xi1>
    %12 = arith.xori %8, %11 : vector<32x1xi1>
    %13 = arith.andi %12, %6 : vector<32x1xi1>
    %14 = vector.broadcast %2 : i32 to vector<32x1xi32>
    %15 = arith.addi %4, %14 : vector<32x1xi32>
    %16 = arith.select %13, %15, %4 : vector<32x1xi1>, vector<32x1xi32>
    %c2_i32 = arith.constant 2 : i32
    %17 = vector.broadcast %c2_i32 : i32 to vector<32x1xi32>
    %18 = arith.cmpi sge, %16, %17 : vector<32x1xi32>
    %c1_i32_3 = arith.constant 1 : i32
    %19 = vector.broadcast %c1_i32_3 : i32 to vector<32x1xi32>
    %20 = arith.cmpi sge, %16, %19 : vector<32x1xi32>
    %c15_i32 = arith.constant 15 : i32
    %21 = vector.broadcast %c15_i32 : i32 to vector<32x1xi32>
    %22 = arith.cmpi slt, %16, %21 : vector<32x1xi32>
    %c14_i32 = arith.constant 14 : i32
    %23 = vector.broadcast %c14_i32 : i32 to vector<32x1xi32>
    %24 = arith.cmpi slt, %16, %23 : vector<32x1xi32>
    %c0 = arith.constant 0 : index
    %c0_4 = arith.constant 0 : index
    %25 = vector.load %arg1[%c0, %c0_4] : memref<32x128xf32, #tpu.memory_space<vmem>>, vector<32x128xf32>
    %c2_i32_5 = arith.constant 2 : i32
    %26 = tpu.dynamic_rotate %25 by %c2_i32_5 dim 0 : vector<32x128xf32>, i32 -> vector<32x128xf32>
    %cst = arith.constant 0.000000e+00 : f32
    %27 = vector.shape_cast %18 : vector<32x1xi1> to vector<32x1xi1>
    %28 = vector.broadcast %27 : vector<32x1xi1> to vector<32x128xi1>
    %29 = vector.broadcast %cst : f32 to vector<32x128xf32>
    %30 = arith.select %28, %26, %29 : vector<32x128xi1>, vector<32x128xf32>
    %31 = arith.truncf %30 : vector<32x128xf32> to vector<32x128xbf16>
    %c0_6 = arith.constant 0 : index
    %c0_7 = arith.constant 0 : index
    %c0_8 = arith.constant 0 : index
    %32 = vector.load %arg2[%c0_6, %c0_7, %c0_8] : memref<5x128x128xbf16, #tpu.memory_space<vmem>>, vector<1x128x128xbf16>
    %33 = vector.shape_cast %32 : vector<1x128x128xbf16> to vector<128x128xbf16>
    %cst_9 = arith.constant dense<0.000000e+00> : vector<32x128xf32>
    %34 = tpu.matmul %31, %33, %cst_9 {dimension_numbers = #tpu.dot_dimension_numbers<[1], [0], [0], [1], [0, 0, 1, 1], [], []>} : vector<32x128xbf16>, vector<128x128xbf16>, vector<32x128xf32> -> vector<32x128xf32>
    %c1_i32_10 = arith.constant 1 : i32
    %35 = tpu.dynamic_rotate %25 by %c1_i32_10 dim 0 : vector<32x128xf32>, i32 -> vector<32x128xf32>
    %cst_11 = arith.constant 0.000000e+00 : f32
    %36 = vector.shape_cast %20 : vector<32x1xi1> to vector<32x1xi1>
    %37 = vector.broadcast %36 : vector<32x1xi1> to vector<32x128xi1>
    %38 = vector.broadcast %cst_11 : f32 to vector<32x128xf32>
    %39 = arith.select %37, %35, %38 : vector<32x128xi1>, vector<32x128xf32>
    %40 = arith.truncf %39 : vector<32x128xf32> to vector<32x128xbf16>
    %c1 = arith.constant 1 : index
    %c0_12 = arith.constant 0 : index
    %c0_13 = arith.constant 0 : index
    %41 = vector.load %arg2[%c1, %c0_12, %c0_13] : memref<5x128x128xbf16, #tpu.memory_space<vmem>>, vector<1x128x128xbf16>
    %42 = vector.shape_cast %41 : vector<1x128x128xbf16> to vector<128x128xbf16>
    %cst_14 = arith.constant dense<0.000000e+00> : vector<32x128xf32>
    %43 = tpu.matmul %40, %42, %cst_14 {dimension_numbers = #tpu.dot_dimension_numbers<[1], [0], [0], [1], [0, 0, 1, 1], [], []>} : vector<32x128xbf16>, vector<128x128xbf16>, vector<32x128xf32> -> vector<32x128xf32>
    %44 = arith.addf %34, %43 : vector<32x128xf32>
    %45 = arith.truncf %25 : vector<32x128xf32> to vector<32x128xbf16>
    %c2 = arith.constant 2 : index
    %c0_15 = arith.constant 0 : index
    %c0_16 = arith.constant 0 : index
    %46 = vector.load %arg2[%c2, %c0_15, %c0_16] : memref<5x128x128xbf16, #tpu.memory_space<vmem>>, vector<1x128x128xbf16>
    %47 = vector.shape_cast %46 : vector<1x128x128xbf16> to vector<128x128xbf16>
    %cst_17 = arith.constant dense<0.000000e+00> : vector<32x128xf32>
    %48 = tpu.matmul %45, %47, %cst_17 {dimension_numbers = #tpu.dot_dimension_numbers<[1], [0], [0], [1], [0, 0, 1, 1], [], []>} : vector<32x128xbf16>, vector<128x128xbf16>, vector<32x128xf32> -> vector<32x128xf32>
    %49 = arith.addf %44, %48 : vector<32x128xf32>
    %c31_i32 = arith.constant 31 : i32
    %50 = tpu.dynamic_rotate %25 by %c31_i32 dim 0 : vector<32x128xf32>, i32 -> vector<32x128xf32>
    %cst_18 = arith.constant 0.000000e+00 : f32
    %51 = vector.shape_cast %22 : vector<32x1xi1> to vector<32x1xi1>
    %52 = vector.broadcast %51 : vector<32x1xi1> to vector<32x128xi1>
    %53 = vector.broadcast %cst_18 : f32 to vector<32x128xf32>
    %54 = arith.select %52, %50, %53 : vector<32x128xi1>, vector<32x128xf32>
    %55 = arith.truncf %54 : vector<32x128xf32> to vector<32x128xbf16>
    %c3 = arith.constant 3 : index
    %c0_19 = arith.constant 0 : index
    %c0_20 = arith.constant 0 : index
    %56 = vector.load %arg2[%c3, %c0_19, %c0_20] : memref<5x128x128xbf16, #tpu.memory_space<vmem>>, vector<1x128x128xbf16>
    %57 = vector.shape_cast %56 : vector<1x128x128xbf16> to vector<128x128xbf16>
    %cst_21 = arith.constant dense<0.000000e+00> : vector<32x128xf32>
    %58 = tpu.matmul %55, %57, %cst_21 {dimension_numbers = #tpu.dot_dimension_numbers<[1], [0], [0], [1], [0, 0, 1, 1], [], []>} : vector<32x128xbf16>, vector<128x128xbf16>, vector<32x128xf32> -> vector<32x128xf32>
    %59 = arith.addf %49, %58 : vector<32x128xf32>
    %c30_i32 = arith.constant 30 : i32
    %60 = tpu.dynamic_rotate %25 by %c30_i32 dim 0 : vector<32x128xf32>, i32 -> vector<32x128xf32>
    %cst_22 = arith.constant 0.000000e+00 : f32
    %61 = vector.shape_cast %24 : vector<32x1xi1> to vector<32x1xi1>
    %62 = vector.broadcast %61 : vector<32x1xi1> to vector<32x128xi1>
    %63 = vector.broadcast %cst_22 : f32 to vector<32x128xf32>
    %64 = arith.select %62, %60, %63 : vector<32x128xi1>, vector<32x128xf32>
    %65 = arith.truncf %64 : vector<32x128xf32> to vector<32x128xbf16>
    %c4 = arith.constant 4 : index
    %c0_23 = arith.constant 0 : index
    %c0_24 = arith.constant 0 : index
    %66 = vector.load %arg2[%c4, %c0_23, %c0_24] : memref<5x128x128xbf16, #tpu.memory_space<vmem>>, vector<1x128x128xbf16>
    %67 = vector.shape_cast %66 : vector<1x128x128xbf16> to vector<128x128xbf16>
    %cst_25 = arith.constant dense<0.000000e+00> : vector<32x128xf32>
    %68 = tpu.matmul %65, %67, %cst_25 {dimension_numbers = #tpu.dot_dimension_numbers<[1], [0], [0], [1], [0, 0, 1, 1], [], []>} : vector<32x128xbf16>, vector<128x128xbf16>, vector<32x128xf32> -> vector<32x128xf32>
    %69 = arith.addf %59, %68 : vector<32x128xf32>
    %c0_26 = arith.constant 0 : index
    %c0_27 = arith.constant 0 : index
    %c0_28 = arith.constant 0 : index
    %70 = vector.load %arg5[%c0_26, %c0_27, %c0_28] : memref<3x1x128xf32, #tpu.memory_space<vmem>>, vector<1x1x128xf32>
    %71 = vector.shape_cast %70 : vector<1x1x128xf32> to vector<1x128xf32>
    %72 = vector.broadcast %71 : vector<1x128xf32> to vector<32x128xf32>
    %73 = arith.mulf %69, %72 : vector<32x128xf32>
    %c0_29 = arith.constant 0 : index
    %c0_30 = arith.constant 0 : index
    %c0_31 = arith.constant 0 : index
    %74 = vector.load %arg6[%c0_29, %c0_30, %c0_31] : memref<3x1x128xf32, #tpu.memory_space<vmem>>, vector<1x1x128xf32>
    %75 = vector.shape_cast %74 : vector<1x1x128xf32> to vector<1x128xf32>
    %76 = vector.broadcast %75 : vector<1x128xf32> to vector<32x128xf32>
    %77 = arith.addf %73, %76 : vector<32x128xf32>
    %cst_32 = arith.constant 0.000000e+00 : f32
    %78 = vector.broadcast %cst_32 : f32 to vector<32x128xf32>
    %79 = arith.maximumf %77, %78 : vector<32x128xf32>
    %c2_i32_33 = arith.constant 2 : i32
    %80 = tpu.dynamic_rotate %79 by %c2_i32_33 dim 0 : vector<32x128xf32>, i32 -> vector<32x128xf32>
    %cst_34 = arith.constant 0.000000e+00 : f32
    %81 = vector.shape_cast %18 : vector<32x1xi1> to vector<32x1xi1>
    %82 = vector.broadcast %81 : vector<32x1xi1> to vector<32x128xi1>
    %83 = vector.broadcast %cst_34 : f32 to vector<32x128xf32>
    %84 = arith.select %82, %80, %83 : vector<32x128xi1>, vector<32x128xf32>
    %85 = arith.truncf %84 : vector<32x128xf32> to vector<32x128xbf16>
    %c0_35 = arith.constant 0 : index
    %c0_36 = arith.constant 0 : index
    %c0_37 = arith.constant 0 : index
    %86 = vector.load %arg3[%c0_35, %c0_36, %c0_37] : memref<5x128x128xbf16, #tpu.memory_space<vmem>>, vector<1x128x128xbf16>
    %87 = vector.shape_cast %86 : vector<1x128x128xbf16> to vector<128x128xbf16>
    %cst_38 = arith.constant dense<0.000000e+00> : vector<32x128xf32>
    %88 = tpu.matmul %85, %87, %cst_38 {dimension_numbers = #tpu.dot_dimension_numbers<[1], [0], [0], [1], [0, 0, 1, 1], [], []>} : vector<32x128xbf16>, vector<128x128xbf16>, vector<32x128xf32> -> vector<32x128xf32>
    %c1_i32_39 = arith.constant 1 : i32
    %89 = tpu.dynamic_rotate %79 by %c1_i32_39 dim 0 : vector<32x128xf32>, i32 -> vector<32x128xf32>
    %cst_40 = arith.constant 0.000000e+00 : f32
    %90 = vector.shape_cast %20 : vector<32x1xi1> to vector<32x1xi1>
    %91 = vector.broadcast %90 : vector<32x1xi1> to vector<32x128xi1>
    %92 = vector.broadcast %cst_40 : f32 to vector<32x128xf32>
    %93 = arith.select %91, %89, %92 : vector<32x128xi1>, vector<32x128xf32>
    %94 = arith.truncf %93 : vector<32x128xf32> to vector<32x128xbf16>
    %c1_41 = arith.constant 1 : index
    %c0_42 = arith.constant 0 : index
    %c0_43 = arith.constant 0 : index
    %95 = vector.load %arg3[%c1_41, %c0_42, %c0_43] : memref<5x128x128xbf16, #tpu.memory_space<vmem>>, vector<1x128x128xbf16>
    %96 = vector.shape_cast %95 : vector<1x128x128xbf16> to vector<128x128xbf16>
    %cst_44 = arith.constant dense<0.000000e+00> : vector<32x128xf32>
    %97 = tpu.matmul %94, %96, %cst_44 {dimension_numbers = #tpu.dot_dimension_numbers<[1], [0], [0], [1], [0, 0, 1, 1], [], []>} : vector<32x128xbf16>, vector<128x128xbf16>, vector<32x128xf32> -> vector<32x128xf32>
    %98 = arith.addf %88, %97 : vector<32x128xf32>
    %99 = arith.truncf %79 : vector<32x128xf32> to vector<32x128xbf16>
    %c2_45 = arith.constant 2 : index
    %c0_46 = arith.constant 0 : index
    %c0_47 = arith.constant 0 : index
    %100 = vector.load %arg3[%c2_45, %c0_46, %c0_47] : memref<5x128x128xbf16, #tpu.memory_space<vmem>>, vector<1x128x128xbf16>
    %101 = vector.shape_cast %100 : vector<1x128x128xbf16> to vector<128x128xbf16>
    %cst_48 = arith.constant dense<0.000000e+00> : vector<32x128xf32>
    %102 = tpu.matmul %99, %101, %cst_48 {dimension_numbers = #tpu.dot_dimension_numbers<[1], [0], [0], [1], [0, 0, 1, 1], [], []>} : vector<32x128xbf16>, vector<128x128xbf16>, vector<32x128xf32> -> vector<32x128xf32>
    %103 = arith.addf %98, %102 : vector<32x128xf32>
    %c31_i32_49 = arith.constant 31 : i32
    %104 = tpu.dynamic_rotate %79 by %c31_i32_49 dim 0 : vector<32x128xf32>, i32 -> vector<32x128xf32>
    %cst_50 = arith.constant 0.000000e+00 : f32
    %105 = vector.shape_cast %22 : vector<32x1xi1> to vector<32x1xi1>
    %106 = vector.broadcast %105 : vector<32x1xi1> to vector<32x128xi1>
    %107 = vector.broadcast %cst_50 : f32 to vector<32x128xf32>
    %108 = arith.select %106, %104, %107 : vector<32x128xi1>, vector<32x128xf32>
    %109 = arith.truncf %108 : vector<32x128xf32> to vector<32x128xbf16>
    %c3_51 = arith.constant 3 : index
    %c0_52 = arith.constant 0 : index
    %c0_53 = arith.constant 0 : index
    %110 = vector.load %arg3[%c3_51, %c0_52, %c0_53] : memref<5x128x128xbf16, #tpu.memory_space<vmem>>, vector<1x128x128xbf16>
    %111 = vector.shape_cast %110 : vector<1x128x128xbf16> to vector<128x128xbf16>
    %cst_54 = arith.constant dense<0.000000e+00> : vector<32x128xf32>
    %112 = tpu.matmul %109, %111, %cst_54 {dimension_numbers = #tpu.dot_dimension_numbers<[1], [0], [0], [1], [0, 0, 1, 1], [], []>} : vector<32x128xbf16>, vector<128x128xbf16>, vector<32x128xf32> -> vector<32x128xf32>
    %113 = arith.addf %103, %112 : vector<32x128xf32>
    %c30_i32_55 = arith.constant 30 : i32
    %114 = tpu.dynamic_rotate %79 by %c30_i32_55 dim 0 : vector<32x128xf32>, i32 -> vector<32x128xf32>
    %cst_56 = arith.constant 0.000000e+00 : f32
    %115 = vector.shape_cast %24 : vector<32x1xi1> to vector<32x1xi1>
    %116 = vector.broadcast %115 : vector<32x1xi1> to vector<32x128xi1>
    %117 = vector.broadcast %cst_56 : f32 to vector<32x128xf32>
    %118 = arith.select %116, %114, %117 : vector<32x128xi1>, vector<32x128xf32>
    %119 = arith.truncf %118 : vector<32x128xf32> to vector<32x128xbf16>
    %c4_57 = arith.constant 4 : index
    %c0_58 = arith.constant 0 : index
    %c0_59 = arith.constant 0 : index
    %120 = vector.load %arg3[%c4_57, %c0_58, %c0_59] : memref<5x128x128xbf16, #tpu.memory_space<vmem>>, vector<1x128x128xbf16>
    %121 = vector.shape_cast %120 : vector<1x128x128xbf16> to vector<128x128xbf16>
    %cst_60 = arith.constant dense<0.000000e+00> : vector<32x128xf32>
    %122 = tpu.matmul %119, %121, %cst_60 {dimension_numbers = #tpu.dot_dimension_numbers<[1], [0], [0], [1], [0, 0, 1, 1], [], []>} : vector<32x128xbf16>, vector<128x128xbf16>, vector<32x128xf32> -> vector<32x128xf32>
    %123 = arith.addf %113, %122 : vector<32x128xf32>
    %c1_61 = arith.constant 1 : index
    %c0_62 = arith.constant 0 : index
    %c0_63 = arith.constant 0 : index
    %124 = vector.load %arg5[%c1_61, %c0_62, %c0_63] : memref<3x1x128xf32, #tpu.memory_space<vmem>>, vector<1x1x128xf32>
    %125 = vector.shape_cast %124 : vector<1x1x128xf32> to vector<1x128xf32>
    %126 = vector.broadcast %125 : vector<1x128xf32> to vector<32x128xf32>
    %127 = arith.mulf %123, %126 : vector<32x128xf32>
    %c1_64 = arith.constant 1 : index
    %c0_65 = arith.constant 0 : index
    %c0_66 = arith.constant 0 : index
    %128 = vector.load %arg6[%c1_64, %c0_65, %c0_66] : memref<3x1x128xf32, #tpu.memory_space<vmem>>, vector<1x1x128xf32>
    %129 = vector.shape_cast %128 : vector<1x1x128xf32> to vector<1x128xf32>
    %130 = vector.broadcast %129 : vector<1x128xf32> to vector<32x128xf32>
    %131 = arith.addf %127, %130 : vector<32x128xf32>
    %cst_67 = arith.constant 0.000000e+00 : f32
    %132 = vector.broadcast %cst_67 : f32 to vector<32x128xf32>
    %133 = arith.maximumf %131, %132 : vector<32x128xf32>
    %c2_i32_68 = arith.constant 2 : i32
    %134 = tpu.dynamic_rotate %133 by %c2_i32_68 dim 0 : vector<32x128xf32>, i32 -> vector<32x128xf32>
    %cst_69 = arith.constant 0.000000e+00 : f32
    %135 = vector.shape_cast %18 : vector<32x1xi1> to vector<32x1xi1>
    %136 = vector.broadcast %135 : vector<32x1xi1> to vector<32x128xi1>
    %137 = vector.broadcast %cst_69 : f32 to vector<32x128xf32>
    %138 = arith.select %136, %134, %137 : vector<32x128xi1>, vector<32x128xf32>
    %139 = arith.truncf %138 : vector<32x128xf32> to vector<32x128xbf16>
    %c0_70 = arith.constant 0 : index
    %c0_71 = arith.constant 0 : index
    %c0_72 = arith.constant 0 : index
    %140 = vector.load %arg4[%c0_70, %c0_71, %c0_72] : memref<5x128x128xbf16, #tpu.memory_space<vmem>>, vector<1x128x128xbf16>
    %141 = vector.shape_cast %140 : vector<1x128x128xbf16> to vector<128x128xbf16>
    %cst_73 = arith.constant dense<0.000000e+00> : vector<32x128xf32>
    %142 = tpu.matmul %139, %141, %cst_73 {dimension_numbers = #tpu.dot_dimension_numbers<[1], [0], [0], [1], [0, 0, 1, 1], [], []>} : vector<32x128xbf16>, vector<128x128xbf16>, vector<32x128xf32> -> vector<32x128xf32>
    %c1_i32_74 = arith.constant 1 : i32
    %143 = tpu.dynamic_rotate %133 by %c1_i32_74 dim 0 : vector<32x128xf32>, i32 -> vector<32x128xf32>
    %cst_75 = arith.constant 0.000000e+00 : f32
    %144 = vector.shape_cast %20 : vector<32x1xi1> to vector<32x1xi1>
    %145 = vector.broadcast %144 : vector<32x1xi1> to vector<32x128xi1>
    %146 = vector.broadcast %cst_75 : f32 to vector<32x128xf32>
    %147 = arith.select %145, %143, %146 : vector<32x128xi1>, vector<32x128xf32>
    %148 = arith.truncf %147 : vector<32x128xf32> to vector<32x128xbf16>
    %c1_76 = arith.constant 1 : index
    %c0_77 = arith.constant 0 : index
    %c0_78 = arith.constant 0 : index
    %149 = vector.load %arg4[%c1_76, %c0_77, %c0_78] : memref<5x128x128xbf16, #tpu.memory_space<vmem>>, vector<1x128x128xbf16>
    %150 = vector.shape_cast %149 : vector<1x128x128xbf16> to vector<128x128xbf16>
    %cst_79 = arith.constant dense<0.000000e+00> : vector<32x128xf32>
    %151 = tpu.matmul %148, %150, %cst_79 {dimension_numbers = #tpu.dot_dimension_numbers<[1], [0], [0], [1], [0, 0, 1, 1], [], []>} : vector<32x128xbf16>, vector<128x128xbf16>, vector<32x128xf32> -> vector<32x128xf32>
    %152 = arith.addf %142, %151 : vector<32x128xf32>
    %153 = arith.truncf %133 : vector<32x128xf32> to vector<32x128xbf16>
    %c2_80 = arith.constant 2 : index
    %c0_81 = arith.constant 0 : index
    %c0_82 = arith.constant 0 : index
    %154 = vector.load %arg4[%c2_80, %c0_81, %c0_82] : memref<5x128x128xbf16, #tpu.memory_space<vmem>>, vector<1x128x128xbf16>
    %155 = vector.shape_cast %154 : vector<1x128x128xbf16> to vector<128x128xbf16>
    %cst_83 = arith.constant dense<0.000000e+00> : vector<32x128xf32>
    %156 = tpu.matmul %153, %155, %cst_83 {dimension_numbers = #tpu.dot_dimension_numbers<[1], [0], [0], [1], [0, 0, 1, 1], [], []>} : vector<32x128xbf16>, vector<128x128xbf16>, vector<32x128xf32> -> vector<32x128xf32>
    %157 = arith.addf %152, %156 : vector<32x128xf32>
    %c31_i32_84 = arith.constant 31 : i32
    %158 = tpu.dynamic_rotate %133 by %c31_i32_84 dim 0 : vector<32x128xf32>, i32 -> vector<32x128xf32>
    %cst_85 = arith.constant 0.000000e+00 : f32
    %159 = vector.shape_cast %22 : vector<32x1xi1> to vector<32x1xi1>
    %160 = vector.broadcast %159 : vector<32x1xi1> to vector<32x128xi1>
    %161 = vector.broadcast %cst_85 : f32 to vector<32x128xf32>
    %162 = arith.select %160, %158, %161 : vector<32x128xi1>, vector<32x128xf32>
    %163 = arith.truncf %162 : vector<32x128xf32> to vector<32x128xbf16>
    %c3_86 = arith.constant 3 : index
    %c0_87 = arith.constant 0 : index
    %c0_88 = arith.constant 0 : index
    %164 = vector.load %arg4[%c3_86, %c0_87, %c0_88] : memref<5x128x128xbf16, #tpu.memory_space<vmem>>, vector<1x128x128xbf16>
    %165 = vector.shape_cast %164 : vector<1x128x128xbf16> to vector<128x128xbf16>
    %cst_89 = arith.constant dense<0.000000e+00> : vector<32x128xf32>
    %166 = tpu.matmul %163, %165, %cst_89 {dimension_numbers = #tpu.dot_dimension_numbers<[1], [0], [0], [1], [0, 0, 1, 1], [], []>} : vector<32x128xbf16>, vector<128x128xbf16>, vector<32x128xf32> -> vector<32x128xf32>
    %167 = arith.addf %157, %166 : vector<32x128xf32>
    %c30_i32_90 = arith.constant 30 : i32
    %168 = tpu.dynamic_rotate %133 by %c30_i32_90 dim 0 : vector<32x128xf32>, i32 -> vector<32x128xf32>
    %cst_91 = arith.constant 0.000000e+00 : f32
    %169 = vector.shape_cast %24 : vector<32x1xi1> to vector<32x1xi1>
    %170 = vector.broadcast %169 : vector<32x1xi1> to vector<32x128xi1>
    %171 = vector.broadcast %cst_91 : f32 to vector<32x128xf32>
    %172 = arith.select %170, %168, %171 : vector<32x128xi1>, vector<32x128xf32>
    %173 = arith.truncf %172 : vector<32x128xf32> to vector<32x128xbf16>
    %c4_92 = arith.constant 4 : index
    %c0_93 = arith.constant 0 : index
    %c0_94 = arith.constant 0 : index
    %174 = vector.load %arg4[%c4_92, %c0_93, %c0_94] : memref<5x128x128xbf16, #tpu.memory_space<vmem>>, vector<1x128x128xbf16>
    %175 = vector.shape_cast %174 : vector<1x128x128xbf16> to vector<128x128xbf16>
    %cst_95 = arith.constant dense<0.000000e+00> : vector<32x128xf32>
    %176 = tpu.matmul %173, %175, %cst_95 {dimension_numbers = #tpu.dot_dimension_numbers<[1], [0], [0], [1], [0, 0, 1, 1], [], []>} : vector<32x128xbf16>, vector<128x128xbf16>, vector<32x128xf32> -> vector<32x128xf32>
    %177 = arith.addf %167, %176 : vector<32x128xf32>
    %c2_96 = arith.constant 2 : index
    %c0_97 = arith.constant 0 : index
    %c0_98 = arith.constant 0 : index
    %178 = vector.load %arg5[%c2_96, %c0_97, %c0_98] : memref<3x1x128xf32, #tpu.memory_space<vmem>>, vector<1x1x128xf32>
    %179 = vector.shape_cast %178 : vector<1x1x128xf32> to vector<1x128xf32>
    %180 = vector.broadcast %179 : vector<1x128xf32> to vector<32x128xf32>
    %181 = arith.mulf %177, %180 : vector<32x128xf32>
    %c2_99 = arith.constant 2 : index
    %c0_100 = arith.constant 0 : index
    %c0_101 = arith.constant 0 : index
    %182 = vector.load %arg6[%c2_99, %c0_100, %c0_101] : memref<3x1x128xf32, #tpu.memory_space<vmem>>, vector<1x1x128xf32>
    %183 = vector.shape_cast %182 : vector<1x1x128xf32> to vector<1x128xf32>
    %184 = vector.broadcast %183 : vector<1x128xf32> to vector<32x128xf32>
    %185 = arith.addf %181, %184 : vector<32x128xf32>
    %cst_102 = arith.constant 0.000000e+00 : f32
    %186 = vector.broadcast %cst_102 : f32 to vector<32x128xf32>
    %187 = arith.maximumf %185, %186 : vector<32x128xf32>
    %c0_103 = arith.constant 0 : index
    %c0_104 = arith.constant 0 : index
    %188 = vector.load %arg7[%c0_103, %c0_104] : memref<32x128xf32, #tpu.memory_space<vmem>>, vector<32x128xf32>
    tpu.vector_store %arg7[%c0_103, %c0_104], %187 {strides = array<i32>} : memref<32x128xf32, #tpu.memory_space<vmem>>, vector<32x128xf32>,
    return
  }
  func.func @transform_0(%arg0: i32) -> (i32, i32) {
    %c0_i32 = arith.constant 0 : i32
    %c0_i32_0 = arith.constant 0 : i32
    return %arg0, %c0_i32 : i32, i32
  }
  func.func @transform_1(%arg0: i32) -> (i32, i32, i32) {
    %c0_i32 = arith.constant 0 : i32
    %c0_i32_0 = arith.constant 0 : i32
    %c0_i32_1 = arith.constant 0 : i32
    %c0_i32_2 = arith.constant 0 : i32
    return %c0_i32, %c0_i32_0, %c0_i32_1 : i32, i32, i32
  }
  func.func @transform_2(%arg0: i32) -> (i32, i32, i32) {
    %c0_i32 = arith.constant 0 : i32
    %c0_i32_0 = arith.constant 0 : i32
    %c0_i32_1 = arith.constant 0 : i32
    %c0_i32_2 = arith.constant 0 : i32
    return %c0_i32, %c0_i32_0, %c0_i32_1 : i32, i32, i32
  }
  func.func @transform_3(%arg0: i32) -> (i32, i32, i32) {
    %c0_i32 = arith.constant 0 : i32
    %c0_i32_0 = arith.constant 0 : i32
    %c0_i32_1 = arith.constant 0 : i32
    %c0_i32_2 = arith.constant 0 : i32
    return %c0_i32, %c0_i32_0, %c0_i32_1 : i32, i32, i32
  }
  func.func @transform_4(%arg0: i32) -> (i32, i32, i32) {
    %c0_i32 = arith.constant 0 : i32
    %c0_i32_0 = arith.constant 0 : i32
    %c0_i32_1 = arith.constant 0 : i32
    %c0_i32_2 = arith.constant 0 : i32
    return %c0_i32, %c0_i32_0, %c0_i32_1 : i32, i32, i32
  }
  func.func @transform_5(%arg0: i32) -> (i32, i32, i32) {
    %c0_i32 = arith.constant 0 : i32
    %c0_i32_0 = arith.constant 0 : i32
    %c0_i32_1 = arith.constant 0 : i32
    %c0_i32_2 = arith.constant 0 : i32
    return %c0_i32, %c0_i32_0, %c0_i32_1 : i32, i32, i32
  }
  func.func @transform_6(%arg0: i32) -> (i32, i32) {
    %c0_i32 = arith.constant 0 : i32
    %c0_i32_0 = arith.constant 0 : i32
    return %arg0, %c0_i32 : i32, i32
  }
}

</mosaic_0001>

<llo_original>
// kernel: tpu_custom_call.1
$region0: #{tpu_custom_call.1}
  #allocation0 [shape = 'u32[]', space=smem, size = 0x4, offset = 0x4, fixed_abs, tag = 'smem constant byte address 0x4 - core index']
  #allocation1 [shape = 'u32[144,128]{1,0:T(1,128)}', space=vmem, size = 0x12000, scoped, tag = 'internal scratch']
  %s0 = inlined_call_operand.hbm [shape: f32[32,128], index: 0, kind: input, shape index: {}]
  %s1 = inlined_call_operand.hbm [shape: bf16[5,128,128], index: 1, kind: input, shape index: {}]
  %s2 = inlined_call_operand.hbm [shape: bf16[5,128,128], index: 2, kind: input, shape index: {}]
  %s3 = inlined_call_operand.hbm [shape: bf16[5,128,128], index: 3, kind: input, shape index: {}]
  %s4 = inlined_call_operand.vmem [shape: f32[3,1,128], index: 4, kind: input, shape index: {}]
  %s5 = inlined_call_operand.vmem [shape: f32[3,1,128], index: 5, kind: input, shape index: {}]
  %s6 = inlined_call_operand.hbm [shape: f32[32,128], index: 6, kind: output, shape index: {}]
  %s7 = sld [smem:[#allocation0]]
  $region50: #{tpu_custom_call.1} parent=0
    _
  %s9 = ssub.s32 1, %s7
  %s10 = scalar_select 0, %s9, %s7
  $region1: #{tpu_custom_call.1} parent=0
    #allocation2 [shape = 'u8[16384]{0}', space=vmem, size = 0x4000, scoped, tag = 'input window, operand 0, single buffered']
    #allocation3 [shape = 's32[1]{0}', space=sflag, size = 0x4, scoped, tag = 'scoped memory for tpu_custom_call.1']
    #allocation4 [shape = 's32[1]{0}', space=sflag, size = 0x4, scoped, tag = 'scoped memory for tpu_custom_call.1']
    #allocation5 [shape = 'u8[163840]{0}', space=vmem, size = 0x28000, scoped, tag = 'input window, operand 1, single buffered']
    #allocation6 [shape = 's32[1]{0}', space=sflag, size = 0x4, scoped, tag = 'scoped memory for tpu_custom_call.1']
    #allocation7 [shape = 'u8[163840]{0}', space=vmem, size = 0x28000, scoped, tag = 'input window, operand 2, single buffered']
    #allocation8 [shape = 'u8[163840]{0}', space=vmem, size = 0x28000, scoped, tag = 'input window, operand 3, single buffered']
    #allocation9 [shape = 's32[1]{0}', space=sflag, size = 0x4, scoped, tag = 'scoped memory for tpu_custom_call.1']
    #allocation10 [shape = 'u8[16384]{0}', space=vmem, size = 0x4000, scoped, tag = 'output window, operand 0, single buffered']
    %11 = vsyncpa [#allocation3], 0
    %12 = vsyncpa [#allocation6], 0
    %13 = vsyncpa [#allocation9], 0
    %14 = vsyncpa [#allocation4], 0
    // Predicated region
    $region2: #{tpu_custom_call.1} parent=1 // pred_check
      _
    $region3: #{tpu_custom_call.1} parent=1 // pred_check_branch
      %16 = sbr.rel (0) target = $region5
    $region4: #{tpu_custom_call.1} parent=1 // pred_region
      %s18 = ssub.s32 512, 512
      %19 = vsyncadd [#allocation3], %s18
      %s20 = sshll.u32 [#allocation2], 4
      %s21 = int_to_ptr.vmem [resolvable:$true] %s20
      %26 = dma.hbm_to_vmem [thread:$0]  %s0, 512, %s21, [#allocation3], 128, 128, 8
    $region5: #{tpu_custom_call.1} parent=1 // pred_fallthru
      _
    // Predicated region
    $region6: #{tpu_custom_call.1} parent=1 // pred_check
      _
    $region7: #{tpu_custom_call.1} parent=1 // pred_check_branch
      %28 = sbr.rel (0) target = $region9
    $region8: #{tpu_custom_call.1} parent=1 // pred_region
      %s30 = ssub.s32 5120, 5120
      %31 = vsyncadd [#allocation6], %s30
      %s32 = sshll.u32 [#allocation5], 4
      %s33 = int_to_ptr.vmem [resolvable:$true] %s32
      %38 = dma.hbm_to_vmem [thread:$0]  %s1, 5120, %s33, [#allocation6], 64, 64, 4
    $region9: #{tpu_custom_call.1} parent=1 // pred_fallthru
      _
    // Predicated region
    $region10: #{tpu_custom_call.1} parent=1 // pred_check
      _
    $region11: #{tpu_custom_call.1} parent=1 // pred_check_branch
      %40 = sbr.rel (0) target = $region13
    $region12: #{tpu_custom_call.1} parent=1 // pred_region
      %s42 = ssub.s32 5120, 5120
      %43 = vsyncadd [#allocation6], %s42
      %s44 = sshll.u32 [#allocation7], 4
      %s45 = int_to_ptr.vmem [resolvable:$true] %s44
      %50 = dma.hbm_to_vmem [thread:$0]  %s2, 5120, %s45, [#allocation6], 64, 64, 4
    $region13: #{tpu_custom_call.1} parent=1 // pred_fallthru
      _
    // Predicated region
    $region14: #{tpu_custom_call.1} parent=1 // pred_check
      _
    $region15: #{tpu_custom_call.1} parent=1 // pred_check_branch
      %52 = sbr.rel (0) target = $region17
    $region16: #{tpu_custom_call.1} parent=1 // pred_region
      %s54 = ssub.s32 5120, 5120
      %55 = vsyncadd [#allocation9], %s54
      %s56 = sshll.u32 [#allocation8], 4
      %s57 = int_to_ptr.vmem [resolvable:$true] %s56
      %62 = dma.hbm_to_vmem [thread:$0]  %s3, 5120, %s57, [#allocation9], 64, 64, 4
    $region17: #{tpu_custom_call.1} parent=1 // pred_fallthru
      _
    // Predicated region
    $region18: #{tpu_custom_call.1} parent=1 // pred_check
      _
    $region19: #{tpu_custom_call.1} parent=1 // pred_check_branch
      %64 = sbr.rel (0) target = $region21
    $region20: #{tpu_custom_call.1} parent=1 // pred_region
      _
    $region21: #{tpu_custom_call.1} parent=1 // pred_fallthru
      _
    // Predicated region
    $region22: #{tpu_custom_call.1} parent=1 // pred_check
      _
    $region23: #{tpu_custom_call.1} parent=1 // pred_check_branch
      %66 = sbr.rel (0) target = $region25
    $region24: #{tpu_custom_call.1} parent=1 // pred_region
      _
    $region25: #{tpu_custom_call.1} parent=1 // pred_fallthru
      _
    // Predicated region
    $region26: #{tpu_custom_call.1} parent=1 // pred_check
      _
    $region27: #{tpu_custom_call.1} parent=1 // pred_check_branch
      %68 = sbr.rel (0) target = $region29
    $region28: #{tpu_custom_call.1} parent=1 // pred_region
      %69 = dma.done [#allocation3], 512
    $region29: #{tpu_custom_call.1} parent=1 // pred_fallthru
      _
    // Predicated region
    $region30: #{tpu_custom_call.1} parent=1 // pred_check
      _
    $region31: #{tpu_custom_call.1} parent=1 // pred_check_branch
      %71 = sbr.rel (0) target = $region33
    $region32: #{tpu_custom_call.1} parent=1 // pred_region
      %72 = dma.done [#allocation6], 5120
    $region33: #{tpu_custom_call.1} parent=1 // pred_fallthru
      _
    // Predicated region
    $region34: #{tpu_custom_call.1} parent=1 // pred_check
      _
    $region35: #{tpu_custom_call.1} parent=1 // pred_check_branch
      %74 = sbr.rel (0) target = $region37
    $region36: #{tpu_custom_call.1} parent=1 // pred_region
      %75 = dma.done [#allocation6], 5120
    $region37: #{tpu_custom_call.1} parent=1 // pred_fallthru
      _
    // Predicated region
    $region38: #{tpu_custom_call.1} parent=1 // pred_check
      _
    $region39: #{tpu_custom_call.1} parent=1 // pred_check_branch
      %77 = sbr.rel (0) target = $region41
    $region40: #{tpu_custom_call.1} parent=1 // pred_region
      %78 = dma.done [#allocation9], 5120
    $region41: #{tpu_custom_call.1} parent=1 // pred_fallthru
      _
    %v80 = vlaneseq
    %v81 = vshrl.u32 %v80, 7
    %v82 = vadd.s32 %v81, 8
    %v83 = vadd.s32 %v81, 16
    %v84 = vadd.s32 %v81, 24
    %vm85 = vcmp.lt.s32.totalorder %v81, 0
    %v86 = vsub.s32 0, %v81
    %v87 = vsel %vm85, %v86, %v81
    %v88 = vshrl.u32 %v87, 4
    %v89 = vand.u32 %v87, 15
    %v90 = vsub.s32 0, %v89
    %v91 = vsel %vm85, %v90, %v89
    %vm92 = vcmp.lt.s32.totalorder %v82, 0
    %v93 = vsub.s32 0, %v82
    %v94 = vsel %vm92, %v93, %v82
    %v95 = vshrl.u32 %v94, 4
    %v96 = vand.u32 %v94, 15
    %v97 = vsub.s32 0, %v96
    %v98 = vsel %vm92, %v97, %v96
    %vm99 = vcmp.lt.s32.totalorder %v83, 0
    %v100 = vsub.s32 0, %v83
    %v101 = vsel %vm99, %v100, %v83
    %v102 = vshrl.u32 %v101, 4
    %v103 = vand.u32 %v101, 15
    %v104 = vsub.s32 0, %v103
    %v105 = vsel %vm99, %v104, %v103
    %vm106 = vcmp.lt.s32.totalorder %v84, 0
    %v107 = vsub.s32 0, %v84
    %v108 = vsel %vm106, %v107, %v84
    %v109 = vshrl.u32 %v108, 4
    %v110 = vand.u32 %v108, 15
    %v111 = vsub.s32 0, %v110
    %v112 = vsel %vm106, %v111, %v110
    %vm113 = vcmp.ne.s32.totalorder %v91, 0
    %vm114 = vcmp.ne.s32.totalorder %v98, 0
    %vm115 = vcmp.ne.s32.totalorder %v105, 0
    %vm116 = vcmp.ne.s32.totalorder %v112, 0
    %vm117 = vcmp.lt.s32.totalorder %v91, 0
    %vm118 = vcmp.lt.s32.totalorder %v98, 0
    %vm119 = vcmp.lt.s32.totalorder %v105, 0
    %vm120 = vcmp.lt.s32.totalorder %v112, 0
    %vm121 = vmand %vm117, %vm113
    %vm122 = vmand %vm118, %vm114
    %vm123 = vmand %vm119, %vm115
    %vm124 = vmand %vm120, %vm116
    %v125 = vadd.s32 %v91, 16
    %v126 = vadd.s32 %v98, 16
    %v127 = vadd.s32 %v105, 16
    %v128 = vadd.s32 %v112, 16
    %v129 = vsel %vm121, %v125, %v91
    %v130 = vsel %vm122, %v126, %v98
    %v131 = vsel %vm123, %v127, %v105
    %v132 = vsel %vm124, %v128, %v112
    %vm133 = vcmp.ge.s32.totalorder %v129, 2
    %vm134 = vcmp.ge.s32.totalorder %v130, 2
    %vm135 = vcmp.ge.s32.totalorder %v131, 2
    %vm136 = vcmp.ge.s32.totalorder %v132, 2
    %vm137 = vcmp.ge.s32.totalorder %v129, 1
    %vm138 = vcmp.ge.s32.totalorder %v130, 1
    %vm139 = vcmp.ge.s32.totalorder %v131, 1
    %vm140 = vcmp.ge.s32.totalorder %v132, 1
    %vm141 = vcmp.lt.s32.totalorder %v129, 15
    %vm142 = vcmp.lt.s32.totalorder %v130, 15
    %vm143 = vcmp.lt.s32.totalorder %v131, 15
    %vm144 = vcmp.lt.s32.totalorder %v132, 15
    %vm145 = vcmp.lt.s32.totalorder %v129, 14
    %vm146 = vcmp.lt.s32.totalorder %v130, 14
    %vm147 = vcmp.lt.s32.totalorder %v131, 14
    %vm148 = vcmp.lt.s32.totalorder %v132, 14
    %v149 = vld [vmem:[#allocation2] sm:$0xff]
    %v150 = vld [vmem:[#allocation2 + $0x8] sm:$0xff]
    %v151 = vld [vmem:[#allocation2 + $0x10] sm:$0xff]
    %v152 = vld [vmem:[#allocation2 + $0x18] sm:$0xff]
    %v153 = vrot.slane %v149, 6
    %v154 = vrot.slane %v150, 6
    %v155 = vrot.slane %v151, 6
    %v156 = vrot.slane %v152, 6
    %vm157 = vcmp.lt.s32.totalorder %v81, 2
    %v158 = vsel %vm157, %v155, %v156
    %v159 = vsel %vm157, %v154, %v155
    %v160 = vsel %vm157, %v153, %v154
    %v161 = vsel %vm157, %v156, %v153
    %v162 = vsel %vm133, 1, 0
    %v163 = vsel %vm134, 1, 0
    %v164 = vsel %vm135, 1, 0
    %v165 = vsel %vm136, 1, 0
    %vm166 = vcmp.eq.s32.totalorder %v162, 1
    %vm167 = vcmp.eq.s32.totalorder %v163, 1
    %vm168 = vcmp.eq.s32.totalorder %v164, 1
    %vm169 = vcmp.eq.s32.totalorder %v165, 1
    %v170 = vsel %vm166, %v161, 0.0
    %v171 = vsel %vm167, %v160, 0.0
    %v172 = vsel %vm168, %v159, 0.0
    %v173 = vsel %vm169, %v158, 0.0
    %v174 = vpack.c.bf16 %v171, %v170
    %v175 = vpack.c.bf16 %v173, %v172
    %v176 = vld [vmem:[#allocation5] sm:$0xf]
    %v177 = vld [vmem:[#allocation5 + $0x4] sm:$0xf]
    %v178 = vld [vmem:[#allocation5 + $0x8] sm:$0xf]
    %v179 = vld [vmem:[#allocation5 + $0xc] sm:$0xf]
    %v180 = vld [vmem:[#allocation5 + $0x10] sm:$0xf]
    %v181 = vld [vmem:[#allocation5 + $0x14] sm:$0xf]
    %v182 = vld [vmem:[#allocation5 + $0x18] sm:$0xf]
    %v183 = vld [vmem:[#allocation5 + $0x1c] sm:$0xf]
    %v184 = vld [vmem:[#allocation5 + $0x20] sm:$0xf]
    %v185 = vld [vmem:[#allocation5 + $0x24] sm:$0xf]
    %v186 = vld [vmem:[#allocation5 + $0x28] sm:$0xf]
    %v187 = vld [vmem:[#allocation5 + $0x2c] sm:$0xf]
    %v188 = vld [vmem:[#allocation5 + $0x30] sm:$0xf]
    %v189 = vld [vmem:[#allocation5 + $0x34] sm:$0xf]
    %v190 = vld [vmem:[#allocation5 + $0x38] sm:$0xf]
    %v191 = vld [vmem:[#allocation5 + $0x3c] sm:$0xf]
    %v192 = vrot.slane %v149, 7
    %v193 = vrot.slane %v150, 7
    %v194 = vrot.slane %v151, 7
    %v195 = vrot.slane %v152, 7
    %vm196 = vcmp.lt.s32.totalorder %v81, 1
    %v197 = vsel %vm196, %v194, %v195
    %v198 = vsel %vm196, %v193, %v194
    %v199 = vsel %vm196, %v192, %v193
    %v200 = vsel %vm196, %v195, %v192
    %v201 = vsel %vm137, 1, 0
    %v202 = vsel %vm138, 1, 0
    %v203 = vsel %vm139, 1, 0
    %v204 = vsel %vm140, 1, 0
    %vm205 = vcmp.eq.s32.totalorder %v201, 1
    %vm206 = vcmp.eq.s32.totalorder %v202, 1
    %vm207 = vcmp.eq.s32.totalorder %v203, 1
    %vm208 = vcmp.eq.s32.totalorder %v204, 1
    %v209 = vsel %vm205, %v200, 0.0
    %v210 = vsel %vm206, %v199, 0.0
    %v211 = vsel %vm207, %v198, 0.0
    %v212 = vsel %vm208, %v197, 0.0
    %v213 = vpack.c.bf16 %v210, %v209
    %v214 = vpack.c.bf16 %v212, %v211
    %s215 = scalar_lea.vmem [#allocation5], 64
    %v216 = vld [vmem:[%s215] sm:$0xf]
    %v217 = vld [vmem:[%s215 + $0x4] sm:$0xf]
    %v218 = vld [vmem:[%s215 + $0x8] sm:$0xf]
    %v219 = vld [vmem:[%s215 + $0xc] sm:$0xf]
    %v220 = vld [vmem:[%s215 + $0x10] sm:$0xf]
    %v221 = vld [vmem:[%s215 + $0x14] sm:$0xf]
    %v222 = vld [vmem:[%s215 + $0x18] sm:$0xf]
    %v223 = vld [vmem:[%s215 + $0x1c] sm:$0xf]
    %v224 = vld [vmem:[%s215 + $0x20] sm:$0xf]
    %v225 = vld [vmem:[%s215 + $0x24] sm:$0xf]
    %v226 = vld [vmem:[%s215 + $0x28] sm:$0xf]
    %v227 = vld [vmem:[%s215 + $0x2c] sm:$0xf]
    %v228 = vld [vmem:[%s215 + $0x30] sm:$0xf]
    %v229 = vld [vmem:[%s215 + $0x34] sm:$0xf]
    %v230 = vld [vmem:[%s215 + $0x38] sm:$0xf]
    %v231 = vld [vmem:[%s215 + $0x3c] sm:$0xf]
    %v248 = vunpack.c.l.b16 %v216
    %v249 = vunpack.c.l.b16 %v217
    %v250 = vunpack.c.l.b16 %v218
    %v251 = vunpack.c.l.b16 %v219
    %v252 = vunpack.c.l.b16 %v220
    %v253 = vunpack.c.l.b16 %v221
    %v254 = vunpack.c.l.b16 %v222
    %v255 = vunpack.c.l.b16 %v223
    %v256 = vunpack.c.l.b16 %v224
    %v257 = vunpack.c.l.b16 %v225
    %v258 = vunpack.c.l.b16 %v226
    %v259 = vunpack.c.l.b16 %v227
    %v260 = vunpack.c.l.b16 %v228
    %v261 = vunpack.c.l.b16 %v229
    %v262 = vunpack.c.l.b16 %v230
    %v263 = vunpack.c.l.b16 %v231
    %v264 = vpack.c.b16 %v249, %v248
    %v265 = vpack.c.b16 %v251, %v250
    %v266 = vpack.c.b16 %v253, %v252
    %v267 = vpack.c.b16 %v255, %v254
    %v268 = vpack.c.b16 %v257, %v256
    %v269 = vpack.c.b16 %v259, %v258
    %v270 = vpack.c.b16 %v261, %v260
    %v271 = vpack.c.b16 %v263, %v262
    %280 = vmatprep.subr.bf16.mxu0 0
    %281 = vmatpush1.bf16.msra.mxu0 %v264
    %282 = vmatprep.subr.bf16.mxu0 0
    %283 = vmatpush1.bf16.msra.mxu0 %v265
    %284 = vmatprep.subr.bf16.mxu0 0
    %285 = vmatpush1.bf16.msra.mxu0 %v266
    %286 = vmatprep.subr.bf16.mxu0 0
    %287 = vmatpush1.bf16.msra.mxu0 %v267
    %288 = vmatprep.subr.bf16.mxu0 0
    %289 = vmatpush1.bf16.msra.mxu0 %v268
    %290 = vmatprep.subr.bf16.mxu0 0
    %291 = vmatpush1.bf16.msra.mxu0 %v269
    %292 = vmatprep.subr.bf16.mxu0 0
    %293 = vmatpush1.bf16.msra.mxu0 %v270
    %294 = vmatprep.subr.bf16.mxu0 0
    %295 = vmatpush1.bf16.msra.mxu0 %v271
    %296 = vmatprep.subr.bf16.mxu0 0
    %297 = vmatpush1.bf16.msra.mxu0 0
    %298 = vmatprep.subr.bf16.mxu0 0
    %299 = vmatpush1.bf16.msra.mxu0 0
    %300 = vmatprep.subr.bf16.mxu0 0
    %301 = vmatpush1.bf16.msra.mxu0 0
    %302 = vmatprep.subr.bf16.mxu0 0
    %303 = vmatpush1.bf16.msra.mxu0 0
    %304 = vmatprep.subr.bf16.mxu0 0
    %305 = vmatpush1.bf16.msra.mxu0 0
    %306 = vmatprep.subr.bf16.mxu0 0
    %307 = vmatpush1.bf16.msra.mxu0 0
    %308 = vmatprep.subr.bf16.mxu0 0
    %309 = vmatpush1.bf16.msra.mxu0 0
    %310 = vmatprep.subr.bf16.mxu0 0
    %311 = vmatpush1.bf16.msra.mxu0 0
    %312 = vmatprep.mubr.bf16.mxu0 0
    %313 = vmatmul.mubr.bf16.gmra.mrb[0].mxu0 %v213
    %v314 = vpop.f32.mrb[0].mxu0
    %v315 = vadd.f32 0.0, %v314
    %v316 = vpop.f32.mrb[0].mxu0
    %v317 = vpop.f32.mrb[0].mxu0
    %v318 = vadd.f32 0.0, %v317
    %v319 = vpop.f32.mrb[0].mxu0
    %320 = vmatprep.mubr.bf16.mxu0 0
    %321 = vmatmul.mubr.bf16.gmra.mrb[0].mxu0 %v214
    %v322 = vpop.f32.mrb[0].mxu0
    %v323 = vadd.f32 0.0, %v322
    %v324 = vpop.f32.mrb[0].mxu0
    %v325 = vpop.f32.mrb[0].mxu0
    %v326 = vadd.f32 0.0, %v325
    %v327 = vpop.f32.mrb[0].mxu0
    %328 = vdwg.mxu0
    %v345 = vunpack.c.l.b16 %v176
    %v346 = vunpack.c.l.b16 %v177
    %v347 = vunpack.c.l.b16 %v178
    %v348 = vunpack.c.l.b16 %v179
    %v349 = vunpack.c.l.b16 %v180
    %v350 = vunpack.c.l.b16 %v181
    %v351 = vunpack.c.l.b16 %v182
    %v352 = vunpack.c.l.b16 %v183
    %v353 = vunpack.c.l.b16 %v184
    %v354 = vunpack.c.l.b16 %v185
    %v355 = vunpack.c.l.b16 %v186
    %v356 = vunpack.c.l.b16 %v187
    %v357 = vunpack.c.l.b16 %v188
    %v358 = vunpack.c.l.b16 %v189
    %v359 = vunpack.c.l.b16 %v190
    %v360 = vunpack.c.l.b16 %v191
    %v361 = vpack.c.b16 %v346, %v345
    %v362 = vpack.c.b16 %v348, %v347
    %v363 = vpack.c.b16 %v350, %v349
    %v364 = vpack.c.b16 %v352, %v351
    %v365 = vpack.c.b16 %v354, %v353
    %v366 = vpack.c.b16 %v356, %v355
    %v367 = vpack.c.b16 %v358, %v357
    %v368 = vpack.c.b16 %v360, %v359
    %377 = vmatprep.subr.bf16.mxu0 0
    %378 = vmatpush1.bf16.msra.mxu0 %v361
    %379 = vmatprep.subr.bf16.mxu0 0
    %380 = vmatpush1.bf16.msra.mxu0 %v362
    %381 = vmatprep.subr.bf16.mxu0 0
    %382 = vmatpush1.bf16.msra.mxu0 %v363
    %383 = vmatprep.subr.bf16.mxu0 0
    %384 = vmatpush1.bf16.msra.mxu0 %v364
    %385 = vmatprep.subr.bf16.mxu0 0
    %386 = vmatpush1.bf16.msra.mxu0 %v365
    %387 = vmatprep.subr.bf16.mxu0 0
    %388 = vmatpush1.bf16.msra.mxu0 %v366
    %389 = vmatprep.subr.bf16.mxu0 0
    %390 = vmatpush1.bf16.msra.mxu0 %v367
    %391 = vmatprep.subr.bf16.mxu0 0
    %392 = vmatpush1.bf16.msra.mxu0 %v368
    %393 = vmatprep.subr.bf16.mxu0 0
    %394 = vmatpush1.bf16.msra.mxu0 0
    %395 = vmatprep.subr.bf16.mxu0 0
    %396 = vmatpush1.bf16.msra.mxu0 0
    %397 = vmatprep.subr.bf16.mxu0 0
    %398 = vmatpush1.bf16.msra.mxu0 0
    %399 = vmatprep.subr.bf16.mxu0 0
    %400 = vmatpush1.bf16.msra.mxu0 0
    %401 = vmatprep.subr.bf16.mxu0 0
    %402 = vmatpush1.bf16.msra.mxu0 0
    %403 = vmatprep.subr.bf16.mxu0 0
    %404 = vmatpush1.bf16.msra.mxu0 0
    %405 = vmatprep.subr.bf16.mxu0 0
    %406 = vmatpush1.bf16.msra.mxu0 0
    %407 = vmatprep.subr.bf16.mxu0 0
    %408 = vmatpush1.bf16.msra.mxu0 0
    %409 = vmatprep.mubr.bf16.mxu0 0
    %410 = vmatmul.mubr.bf16.gmra.mrb[0].mxu0 %v174
    %v411 = vpop.f32.mrb[0].mxu0
    %v412 = vadd.f32 %v315, %v411
    %v413 = vpop.f32.mrb[0].mxu0
    %v414 = vpop.f32.mrb[0].mxu0
    %v415 = vadd.f32 %v318, %v414
    %v416 = vpop.f32.mrb[0].mxu0
    %417 = vmatprep.mubr.bf16.mxu0 0
    %418 = vmatmul.mubr.bf16.gmra.mrb[0].mxu0 %v175
    %v419 = vpop.f32.mrb[0].mxu0
    %v420 = vadd.f32 %v323, %v419
    %v421 = vpop.f32.mrb[0].mxu0
    %v422 = vpop.f32.mrb[0].mxu0
    %v423 = vadd.f32 %v326, %v422
    %v424 = vpop.f32.mrb[0].mxu0
    %425 = vdwg.mxu0
    %v426 = vpack.c.bf16 %v150, %v149
    %v427 = vpack.c.bf16 %v152, %v151
    %s428 = scalar_lea.vmem [#allocation5], 128
    %v429 = vld [vmem:[%s428] sm:$0xf]
    %v430 = vld [vmem:[%s428 + $0x4] sm:$0xf]
    %v431 = vld [vmem:[%s428 + $0x8] sm:$0xf]
    %v432 = vld [vmem:[%s428 + $0xc] sm:$0xf]
    %v433 = vld [vmem:[%s428 + $0x10] sm:$0xf]
    %v434 = vld [vmem:[%s428 + $0x14] sm:$0xf]
    %v435 = vld [vmem:[%s428 + $0x18] sm:$0xf]
    %v436 = vld [vmem:[%s428 + $0x1c] sm:$0xf]
    %v437 = vld [vmem:[%s428 + $0x20] sm:$0xf]
    %v438 = vld [vmem:[%s428 + $0x24] sm:$0xf]
    %v439 = vld [vmem:[%s428 + $0x28] sm:$0xf]
    %v440 = vld [vmem:[%s428 + $0x2c] sm:$0xf]
    %v441 = vld [vmem:[%s428 + $0x30] sm:$0xf]
    %v442 = vld [vmem:[%s428 + $0x34] sm:$0xf]
    %v443 = vld [vmem:[%s428 + $0x38] sm:$0xf]
    %v444 = vld [vmem:[%s428 + $0x3c] sm:$0xf]
    %v461 = vunpack.c.l.b16 %v429
    %v462 = vunpack.c.l.b16 %v430
    %v463 = vunpack.c.l.b16 %v431
    %v464 = vunpack.c.l.b16 %v432
    %v465 = vunpack.c.l.b16 %v433
    %v466 = vunpack.c.l.b16 %v434
    %v467 = vunpack.c.l.b16 %v435
    %v468 = vunpack.c.l.b16 %v436
    %v469 = vunpack.c.l.b16 %v437
    %v470 = vunpack.c.l.b16 %v438
    %v471 = vunpack.c.l.b16 %v439
    %v472 = vunpack.c.l.b16 %v440
    %v473 = vunpack.c.l.b16 %v441
    %v474 = vunpack.c.l.b16 %v442
    %v475 = vunpack.c.l.b16 %v443
    %v476 = vunpack.c.l.b16 %v444
    %v477 = vpack.c.b16 %v462, %v461
    %v478 = vpack.c.b16 %v464, %v463
    %v479 = vpack.c.b16 %v466, %v465
    %v480 = vpack.c.b16 %v468, %v467
    %v481 = vpack.c.b16 %v470, %v469
    %v482 = vpack.c.b16 %v472, %v471
    %v483 = vpack.c.b16 %v474, %v473
    %v484 = vpack.c.b16 %v476, %v475
    %493 = vmatprep.subr.bf16.mxu0 0
    %494 = vmatpush1.bf16.msra.mxu0 %v477
    %495 = vmatprep.subr.bf16.mxu0 0
    %496 = vmatpush1.bf16.msra.mxu0 %v478
    %497 = vmatprep.subr.bf16.mxu0 0
    %498 = vmatpush1.bf16.msra.mxu0 %v479
    %499 = vmatprep.subr.bf16.mxu0 0
    %500 = vmatpush1.bf16.msra.mxu0 %v480
    %501 = vmatprep.subr.bf16.mxu0 0
    %502 = vmatpush1.bf16.msra.mxu0 %v481
    %503 = vmatprep.subr.bf16.mxu0 0
    %504 = vmatpush1.bf16.msra.mxu0 %v482
    %505 = vmatprep.subr.bf16.mxu0 0
    %506 = vmatpush1.bf16.msra.mxu0 %v483
    %507 = vmatprep.subr.bf16.mxu0 0
    %508 = vmatpush1.bf16.msra.mxu0 %v484
    %509 = vmatprep.subr.bf16.mxu0 0
    %510 = vmatpush1.bf16.msra.mxu0 0
    %511 = vmatprep.subr.bf16.mxu0 0
    %512 = vmatpush1.bf16.msra.mxu0 0
    %513 = vmatprep.subr.bf16.mxu0 0
    %514 = vmatpush1.bf16.msra.mxu0 0
    %515 = vmatprep.subr.bf16.mxu0 0
    %516 = vmatpush1.bf16.msra.mxu0 0
    %517 = vmatprep.subr.bf16.mxu0 0
    %518 = vmatpush1.bf16.msra.mxu0 0
    %519 = vmatprep.subr.bf16.mxu0 0
    %520 = vmatpush1.bf16.msra.mxu0 0
    %521 = vmatprep.subr.bf16.mxu0 0
    %522 = vmatpush1.bf16.msra.mxu0 0
    %523 = vmatprep.subr.bf16.mxu0 0
    %524 = vmatpush1.bf16.msra.mxu0 0
    %525 = vmatprep.mubr.bf16.mxu0 0
    %526 = vmatmul.mubr.bf16.gmra.mrb[0].mxu0 %v426
    %v527 = vpop.f32.mrb[0].mxu0
    %v528 = vadd.f32 0.0, %v527
    %v529 = vpop.f32.mrb[0].mxu0
    %v530 = vpop.f32.mrb[0].mxu0
    %v531 = vadd.f32 0.0, %v530
    %v532 = vpop.f32.mrb[0].mxu0
    %533 = vmatprep.mubr.bf16.mxu0 0
    %534 = vmatmul.mubr.bf16.gmra.mrb[0].mxu0 %v427
    %v535 = vpop.f32.mrb[0].mxu0
    %v536 = vadd.f32 0.0, %v535
    %v537 = vpop.f32.mrb[0].mxu0
    %v538 = vpop.f32.mrb[0].mxu0
    %v539 = vadd.f32 0.0, %v538
    %v540 = vpop.f32.mrb[0].mxu0
    %541 = vdwg.mxu0
    %v542 = vadd.f32 %v412, %v528
    %v543 = vadd.f32 %v415, %v531
    %v544 = vadd.f32 %v420, %v536
    %v545 = vadd.f32 %v423, %v539
    %v546 = vrot.slane %v149, 1
    %v547 = vrot.slane %v150, 1
    %v548 = vrot.slane %v151, 1
    %v549 = vrot.slane %v152, 1
    %vm550 = vcmp.lt.s32.totalorder %v81, 7
    %v551 = vsel %vm550, %v548, %v549
    %v552 = vsel %vm550, %v547, %v548
    %v553 = vsel %vm550, %v546, %v547
    %v554 = vsel %vm550, %v549, %v546
    %v555 = vsel %vm141, 1, 0
    %v556 = vsel %vm142, 1, 0
    %v557 = vsel %vm143, 1, 0
    %v558 = vsel %vm144, 1, 0
    %vm559 = vcmp.eq.s32.totalorder %v555, 1
    %vm560 = vcmp.eq.s32.totalorder %v556, 1
    %vm561 = vcmp.eq.s32.totalorder %v557, 1
    %vm562 = vcmp.eq.s32.totalorder %v558, 1
    %v563 = vsel %vm559, %v553, 0.0
    %v564 = vsel %vm560, %v552, 0.0
    %v565 = vsel %vm561, %v551, 0.0
    %v566 = vsel %vm562, %v554, 0.0
    %v567 = vpack.c.bf16 %v564, %v563
    %v568 = vpack.c.bf16 %v566, %v565
    %s569 = scalar_lea.vmem [#allocation5], 192
    %v570 = vld [vmem:[%s569] sm:$0xf]
    %v571 = vld [vmem:[%s569 + $0x4] sm:$0xf]
    %v572 = vld [vmem:[%s569 + $0x8] sm:$0xf]
    %v573 = vld [vmem:[%s569 + $0xc] sm:$0xf]
    %v574 = vld [vmem:[%s569 + $0x10] sm:$0xf]
    %v575 = vld [vmem:[%s569 + $0x14] sm:$0xf]
    %v576 = vld [vmem:[%s569 + $0x18] sm:$0xf]
    %v577 = vld [vmem:[%s569 + $0x1c] sm:$0xf]
    %v578 = vld [vmem:[%s569 + $0x20] sm:$0xf]
    %v579 = vld [vmem:[%s569 + $0x24] sm:$0xf]
    %v580 = vld [vmem:[%s569 + $0x28] sm:$0xf]
    %v581 = vld [vmem:[%s569 + $0x2c] sm:$0xf]
    %v582 = vld [vmem:[%s569 + $0x30] sm:$0xf]
    %v583 = vld [vmem:[%s569 + $0x34] sm:$0xf]
    %v584 = vld [vmem:[%s569 + $0x38] sm:$0xf]
    %v585 = vld [vmem:[%s569 + $0x3c] sm:$0xf]
    %v602 = vunpack.c.l.b16 %v570
    %v603 = vunpack.c.l.b16 %v571
    %v604 = vunpack.c.l.b16 %v572
    %v605 = vunpack.c.l.b16 %v573
    %v606 = vunpack.c.l.b16 %v574
    %v607 = vunpack.c.l.b16 %v575
    %v608 = vunpack.c.l.b16 %v576
    %v609 = vunpack.c.l.b16 %v577
    %v610 = vunpack.c.l.b16 %v578
    %v611 = vunpack.c.l.b16 %v579
    %v612 = vunpack.c.l.b16 %v580
    %v613 = vunpack.c.l.b16 %v581
    %v614 = vunpack.c.l.b16 %v582
    %v615 = vunpack.c.l.b16 %v583
    %v616 = vunpack.c.l.b16 %v584
    %v617 = vunpack.c.l.b16 %v585
    %v618 = vpack.c.b16 %v603, %v602
    %v619 = vpack.c.b16 %v605, %v604
    %v620 = vpack.c.b16 %v607, %v606
    %v621 = vpack.c.b16 %v609, %v608
    %v622 = vpack.c.b16 %v611, %v610
    %v623 = vpack.c.b16 %v613, %v612
    %v624 = vpack.c.b16 %v615, %v614
    %v625 = vpack.c.b16 %v617, %v616
    %634 = vmatprep.subr.bf16.mxu0 0
    %635 = vmatpush1.bf16.msra.mxu0 %v618
    %636 = vmatprep.subr.bf16.mxu0 0
    %637 = vmatpush1.bf16.msra.mxu0 %v619
    %638 = vmatprep.subr.bf16.mxu0 0
    %639 = vmatpush1.bf16.msra.mxu0 %v620
    %640 = vmatprep.subr.bf16.mxu0 0
    %641 = vmatpush1.bf16.msra.mxu0 %v621
    %642 = vmatprep.subr.bf16.mxu0 0
    %643 = vmatpush1.bf16.msra.mxu0 %v622
    %644 = vmatprep.subr.bf16.mxu0 0
    %645 = vmatpush1.bf16.msra.mxu0 %v623
    %646 = vmatprep.subr.bf16.mxu0 0
    %647 = vmatpush1.bf16.msra.mxu0 %v624
    %648 = vmatprep.subr.bf16.mxu0 0
    %649 = vmatpush1.bf16.msra.mxu0 %v625
    %650 = vmatprep.subr.bf16.mxu0 0
    %651 = vmatpush1.bf16.msra.mxu0 0
    %652 = vmatprep.subr.bf16.mxu0 0
    %653 = vmatpush1.bf16.msra.mxu0 0
    %654 = vmatprep.subr.bf16.mxu0 0
    %655 = vmatpush1.bf16.msra.mxu0 0
    %656 = vmatprep.subr.bf16.mxu0 0
    %657 = vmatpush1.bf16.msra.mxu0 0
    %658 = vmatprep.subr.bf16.mxu0 0
    %659 = vmatpush1.bf16.msra.mxu0 0
    %660 = vmatprep.subr.bf16.mxu0 0
    %661 = vmatpush1.bf16.msra.mxu0 0
    %662 = vmatprep.subr.bf16.mxu0 0
    %663 = vmatpush1.bf16.msra.mxu0 0
    %664 = vmatprep.subr.bf16.mxu0 0
    %665 = vmatpush1.bf16.msra.mxu0 0
    %666 = vmatprep.mubr.bf16.mxu0 0
    %667 = vmatmul.mubr.bf16.gmra.mrb[0].mxu0 %v567
    %v668 = vpop.f32.mrb[0].mxu0
    %v669 = vadd.f32 0.0, %v668
    %v670 = vpop.f32.mrb[0].mxu0
    %v671 = vpop.f32.mrb[0].mxu0
    %v672 = vadd.f32 0.0, %v671
    %v673 = vpop.f32.mrb[0].mxu0
    %674 = vmatprep.mubr.bf16.mxu0 0
    %675 = vmatmul.mubr.bf16.gmra.mrb[0].mxu0 %v568
    %v676 = vpop.f32.mrb[0].mxu0
    %v677 = vadd.f32 0.0, %v676
    %v678 = vpop.f32.mrb[0].mxu0
    %v679 = vpop.f32.mrb[0].mxu0
    %v680 = vadd.f32 0.0, %v679
    %v681 = vpop.f32.mrb[0].mxu0
    %682 = vdwg.mxu0
    %v683 = vadd.f32 %v542, %v669
    %v684 = vadd.f32 %v543, %v672
    %v685 = vadd.f32 %v544, %v677
    %v686 = vadd.f32 %v545, %v680
    %v687 = vrot.slane %v149, 2
    %v688 = vrot.slane %v150, 2
    %v689 = vrot.slane %v151, 2
    %v690 = vrot.slane %v152, 2
    %vm691 = vcmp.lt.s32.totalorder %v81, 6
    %v692 = vsel %vm691, %v689, %v690
    %v693 = vsel %vm691, %v688, %v689
    %v694 = vsel %vm691, %v687, %v688
    %v695 = vsel %vm691, %v690, %v687
    %v696 = vsel %vm145, 1, 0
    %v697 = vsel %vm146, 1, 0
    %v698 = vsel %vm147, 1, 0
    %v699 = vsel %vm148, 1, 0
    %vm700 = vcmp.eq.s32.totalorder %v696, 1
    %vm701 = vcmp.eq.s32.totalorder %v697, 1
    %vm702 = vcmp.eq.s32.totalorder %v698, 1
    %vm703 = vcmp.eq.s32.totalorder %v699, 1
    %v704 = vsel %vm700, %v694, 0.0
    %v705 = vsel %vm701, %v693, 0.0
    %v706 = vsel %vm702, %v692, 0.0
    %v707 = vsel %vm703, %v695, 0.0
    %v708 = vpack.c.bf16 %v705, %v704
    %v709 = vpack.c.bf16 %v707, %v706
    %s710 = scalar_lea.vmem [#allocation5], 256
    %v711 = vld [vmem:[%s710] sm:$0xf]
    %v712 = vld [vmem:[%s710 + $0x4] sm:$0xf]
    %v713 = vld [vmem:[%s710 + $0x8] sm:$0xf]
    %v714 = vld [vmem:[%s710 + $0xc] sm:$0xf]
    %v715 = vld [vmem:[%s710 + $0x10] sm:$0xf]
    %v716 = vld [vmem:[%s710 + $0x14] sm:$0xf]
    %v717 = vld [vmem:[%s710 + $0x18] sm:$0xf]
    %v718 = vld [vmem:[%s710 + $0x1c] sm:$0xf]
    %v719 = vld [vmem:[%s710 + $0x20] sm:$0xf]
    %v720 = vld [vmem:[%s710 + $0x24] sm:$0xf]
    %v721 = vld [vmem:[%s710 + $0x28] sm:$0xf]
    %v722 = vld [vmem:[%s710 + $0x2c] sm:$0xf]
    %v723 = vld [vmem:[%s710 + $0x30] sm:$0xf]
    %v724 = vld [vmem:[%s710 + $0x34] sm:$0xf]
    %v725 = vld [vmem:[%s710 + $0x38] sm:$0xf]
    %v726 = vld [vmem:[%s710 + $0x3c] sm:$0xf]
    %v743 = vunpack.c.l.b16 %v711
    %v744 = vunpack.c.l.b16 %v712
    %v745 = vunpack.c.l.b16 %v713
    %v746 = vunpack.c.l.b16 %v714
    %v747 = vunpack.c.l.b16 %v715
    %v748 = vunpack.c.l.b16 %v716
    %v749 = vunpack.c.l.b16 %v717
    %v750 = vunpack.c.l.b16 %v718
    %v751 = vunpack.c.l.b16 %v719
    %v752 = vunpack.c.l.b16 %v720
    %v753 = vunpack.c.l.b16 %v721
    %v754 = vunpack.c.l.b16 %v722
    %v755 = vunpack.c.l.b16 %v723
    %v756 = vunpack.c.l.b16 %v724
    %v757 = vunpack.c.l.b16 %v725
    %v758 = vunpack.c.l.b16 %v726
    %v759 = vpack.c.b16 %v744, %v743
    %v760 = vpack.c.b16 %v746, %v745
    %v761 = vpack.c.b16 %v748, %v747
    %v762 = vpack.c.b16 %v750, %v749
    %v763 = vpack.c.b16 %v752, %v751
    %v764 = vpack.c.b16 %v754, %v753
    %v765 = vpack.c.b16 %v756, %v755
    %v766 = vpack.c.b16 %v758, %v757
    %775 = vmatprep.subr.bf16.mxu0 0
    %776 = vmatpush1.bf16.msra.mxu0 %v759
    %777 = vmatprep.subr.bf16.mxu0 0
    %778 = vmatpush1.bf16.msra.mxu0 %v760
    %779 = vmatprep.subr.bf16.mxu0 0
    %780 = vmatpush1.bf16.msra.mxu0 %v761
    %781 = vmatprep.subr.bf16.mxu0 0
    %782 = vmatpush1.bf16.msra.mxu0 %v762
    %783 = vmatprep.subr.bf16.mxu0 0
    %784 = vmatpush1.bf16.msra.mxu0 %v763
    %785 = vmatprep.subr.bf16.mxu0 0
    %786 = vmatpush1.bf16.msra.mxu0 %v764
    %787 = vmatprep.subr.bf16.mxu0 0
    %788 = vmatpush1.bf16.msra.mxu0 %v765
    %789 = vmatprep.subr.bf16.mxu0 0
    %790 = vmatpush1.bf16.msra.mxu0 %v766
    %791 = vmatprep.subr.bf16.mxu0 0
    %792 = vmatpush1.bf16.msra.mxu0 0
    %793 = vmatprep.subr.bf16.mxu0 0
    %794 = vmatpush1.bf16.msra.mxu0 0
    %795 = vmatprep.subr.bf16.mxu0 0
    %796 = vmatpush1.bf16.msra.mxu0 0
    %797 = vmatprep.subr.bf16.mxu0 0
    %798 = vmatpush1.bf16.msra.mxu0 0
    %799 = vmatprep.subr.bf16.mxu0 0
    %800 = vmatpush1.bf16.msra.mxu0 0
    %801 = vmatprep.subr.bf16.mxu0 0
    %802 = vmatpush1.bf16.msra.mxu0 0
    %803 = vmatprep.subr.bf16.mxu0 0
    %804 = vmatpush1.bf16.msra.mxu0 0
    %805 = vmatprep.subr.bf16.mxu0 0
    %806 = vmatpush1.bf16.msra.mxu0 0
    %807 = vmatprep.mubr.bf16.mxu0 0
    %808 = vmatmul.mubr.bf16.gmra.mrb[0].mxu0 %v708
    %v809 = vpop.f32.mrb[0].mxu0
    %v810 = vadd.f32 0.0, %v809
    %v811 = vpop.f32.mrb[0].mxu0
    %v812 = vpop.f32.mrb[0].mxu0
    %v813 = vadd.f32 0.0, %v812
    %v814 = vpop.f32.mrb[0].mxu0
    %815 = vmatprep.mubr.bf16.mxu0 0
    %816 = vmatmul.mubr.bf16.gmra.mrb[0].mxu0 %v709
    %v817 = vpop.f32.mrb[0].mxu0
    %v818 = vadd.f32 0.0, %v817
    %v819 = vpop.f32.mrb[0].mxu0
    %v820 = vpop.f32.mrb[0].mxu0
    %v821 = vadd.f32 0.0, %v820
    %v822 = vpop.f32.mrb[0].mxu0
    %823 = vdwg.mxu0
    %v824 = vadd.f32 %v683, %v810
    %v825 = vadd.f32 %v684, %v813
    %v826 = vadd.f32 %v685, %v818
    %v827 = vadd.f32 %v686, %v821
    %v828 = vld [vmem:[%s4] sm:$0x1]
    %v830 = vlaneseq
    %v831 = vshrl.u32 %v830, 7
    %v832 = vsub.s32 0, %v831
    %v833 = vrot.slane %v828, %v832
    %v835 = vmul.f32 %v824, %v833
    %v836 = vmul.f32 %v825, %v833
    %v837 = vmul.f32 %v826, %v833
    %v838 = vmul.f32 %v827, %v833
    %v839 = vld [vmem:[%s5] sm:$0x1]
    %v841 = vlaneseq
    %v842 = vshrl.u32 %v841, 7
    %v843 = vsub.s32 0, %v842
    %v844 = vrot.slane %v839, %v843
    %v846 = vadd.f32 %v835, %v844
    %v847 = vadd.f32 %v836, %v844
    %v848 = vadd.f32 %v837, %v844
    %v849 = vadd.f32 %v838, %v844
    %v850 = vmax.f32 %v846, 0.0
    %v851 = vmax.f32 %v847, 0.0
    %v852 = vmax.f32 %v848, 0.0
    %v853 = vmax.f32 %v849, 0.0
    %v854 = vrot.slane %v850, 6
    %v855 = vrot.slane %v851, 6
    %v856 = vrot.slane %v852, 6
    %v857 = vrot.slane %v853, 6
    %v858 = vsel %vm157, %v856, %v857
    %v859 = vsel %vm157, %v855, %v856
    %v860 = vsel %vm157, %v854, %v855
    %v861 = vsel %vm157, %v857, %v854
    %v862 = vsel %vm166, %v861, 0.0
    %v863 = vsel %vm167, %v860, 0.0
    %v864 = vsel %vm168, %v859, 0.0
    %v865 = vsel %vm169, %v858, 0.0
    %v866 = vpack.c.bf16 %v863, %v862
    %v867 = vpack.c.bf16 %v865, %v864
    %v868 = vld [vmem:[#allocation7] sm:$0xf]
    %v869 = vld [vmem:[#allocation7 + $0x4] sm:$0xf]
    %v870 = vld [vmem:[#allocation7 + $0x8] sm:$0xf]
    %v871 = vld [vmem:[#allocation7 + $0xc] sm:$0xf]
    %v872 = vld [vmem:[#allocation7 + $0x10] sm:$0xf]
    %v873 = vld [vmem:[#allocation7 + $0x14] sm:$0xf]
    %v874 = vld [vmem:[#allocation7 + $0x18] sm:$0xf]
    %v875 = vld [vmem:[#allocation7 + $0x1c] sm:$0xf]
    %v876 = vld [vmem:[#allocation7 + $0x20] sm:$0xf]
    %v877 = vld [vmem:[#allocation7 + $0x24] sm:$0xf]
    %v878 = vld [vmem:[#allocation7 + $0x28] sm:$0xf]
    %v879 = vld [vmem:[#allocation7 + $0x2c] sm:$0xf]
    %v880 = vld [vmem:[#allocation7 + $0x30] sm:$0xf]
    %v881 = vld [vmem:[#allocation7 + $0x34] sm:$0xf]
    %v882 = vld [vmem:[#allocation7 + $0x38] sm:$0xf]
    %v883 = vld [vmem:[#allocation7 + $0x3c] sm:$0xf]
    %v884 = vrot.slane %v850, 7
    %v885 = vrot.slane %v851, 7
    %v886 = vrot.slane %v852, 7
    %v887 = vrot.slane %v853, 7
    %v888 = vsel %vm196, %v886, %v887
    %v889 = vsel %vm196, %v885, %v886
    %v890 = vsel %vm196, %v884, %v885
    %v891 = vsel %vm196, %v887, %v884
    %v892 = vsel %vm205, %v891, 0.0
    %v893 = vsel %vm206, %v890, 0.0
    %v894 = vsel %vm207, %v889, 0.0
    %v895 = vsel %vm208, %v888, 0.0
    %v896 = vpack.c.bf16 %v893, %v892
    %v897 = vpack.c.bf16 %v895, %v894
    %s898 = scalar_lea.vmem [#allocation7], 64
    %v899 = vld [vmem:[%s898] sm:$0xf]
    %v900 = vld [vmem:[%s898 + $0x4] sm:$0xf]
    %v901 = vld [vmem:[%s898 + $0x8] sm:$0xf]
    %v902 = vld [vmem:[%s898 + $0xc] sm:$0xf]
    %v903 = vld [vmem:[%s898 + $0x10] sm:$0xf]
    %v904 = vld [vmem:[%s898 + $0x14] sm:$0xf]
    %v905 = vld [vmem:[%s898 + $0x18] sm:$0xf]
    %v906 = vld [vmem:[%s898 + $0x1c] sm:$0xf]
    %v907 = vld [vmem:[%s898 + $0x20] sm:$0xf]
    %v908 = vld [vmem:[%s898 + $0x24] sm:$0xf]
    %v909 = vld [vmem:[%s898 + $0x28] sm:$0xf]
    %v910 = vld [vmem:[%s898 + $0x2c] sm:$0xf]
    %v911 = vld [vmem:[%s898 + $0x30] sm:$0xf]
    %v912 = vld [vmem:[%s898 + $0x34] sm:$0xf]
    %v913 = vld [vmem:[%s898 + $0x38] sm:$0xf]
    %v914 = vld [vmem:[%s898 + $0x3c] sm:$0xf]
    %v931 = vunpack.c.l.b16 %v899
    %v932 = vunpack.c.l.b16 %v900
    %v933 = vunpack.c.l.b16 %v901
    %v934 = vunpack.c.l.b16 %v902
    %v935 = vunpack.c.l.b16 %v903
    %v936 = vunpack.c.l.b16 %v904
    %v937 = vunpack.c.l.b16 %v905
    %v938 = vunpack.c.l.b16 %v906
    %v939 = vunpack.c.l.b16 %v907
    %v940 = vunpack.c.l.b16 %v908
    %v941 = vunpack.c.l.b16 %v909
    %v942 = vunpack.c.l.b16 %v910
    %v943 = vunpack.c.l.b16 %v911
    %v944 = vunpack.c.l.b16 %v912
    %v945 = vunpack.c.l.b16 %v913
    %v946 = vunpack.c.l.b16 %v914
    %v947 = vpack.c.b16 %v932, %v931
    %v948 = vpack.c.b16 %v934, %v933
    %v949 = vpack.c.b16 %v936, %v935
    %v950 = vpack.c.b16 %v938, %v937
    %v951 = vpack.c.b16 %v940, %v939
    %v952 = vpack.c.b16 %v942, %v941
    %v953 = vpack.c.b16 %v944, %v943
    %v954 = vpack.c.b16 %v946, %v945
    %963 = vmatprep.subr.bf16.mxu0 0
    %964 = vmatpush1.bf16.msra.mxu0 %v947
    %965 = vmatprep.subr.bf16.mxu0 0
    %966 = vmatpush1.bf16.msra.mxu0 %v948
    %967 = vmatprep.subr.bf16.mxu0 0
    %968 = vmatpush1.bf16.msra.mxu0 %v949
    %969 = vmatprep.subr.bf16.mxu0 0
    %970 = vmatpush1.bf16.msra.mxu0 %v950
    %971 = vmatprep.subr.bf16.mxu0 0
    %972 = vmatpush1.bf16.msra.mxu0 %v951
    %973 = vmatprep.subr.bf16.mxu0 0
    %974 = vmatpush1.bf16.msra.mxu0 %v952
    %975 = vmatprep.subr.bf16.mxu0 0
    %976 = vmatpush1.bf16.msra.mxu0 %v953
    %977 = vmatprep.subr.bf16.mxu0 0
    %978 = vmatpush1.bf16.msra.mxu0 %v954
    %979 = vmatprep.subr.bf16.mxu0 0
    %980 = vmatpush1.bf16.msra.mxu0 0
    %981 = vmatprep.subr.bf16.mxu0 0
    %982 = vmatpush1.bf16.msra.mxu0 0
    %983 = vmatprep.subr.bf16.mxu0 0
    %984 = vmatpush1.bf16.msra.mxu0 0
    %985 = vmatprep.subr.bf16.mxu0 0
    %986 = vmatpush1.bf16.msra.mxu0 0
    %987 = vmatprep.subr.bf16.mxu0 0
    %988 = vmatpush1.bf16.msra.mxu0 0
    %989 = vmatprep.subr.bf16.mxu0 0
    %990 = vmatpush1.bf16.msra.mxu0 0
    %991 = vmatprep.subr.bf16.mxu0 0
    %992 = vmatpush1.bf16.msra.mxu0 0
    %993 = vmatprep.subr.bf16.mxu0 0
    %994 = vmatpush1.bf16.msra.mxu0 0
    %995 = vmatprep.mubr.bf16.mxu0 0
    %996 = vmatmul.mubr.bf16.gmra.mrb[0].mxu0 %v896
    %v997 = vpop.f32.mrb[0].mxu0
    %v998 = vadd.f32 0.0, %v997
    %v999 = vpop.f32.mrb[0].mxu0
    %v1000 = vpop.f32.mrb[0].mxu0
    %v1001 = vadd.f32 0.0, %v1000
    %v1002 = vpop.f32.mrb[0].mxu0
    %1003 = vmatprep.mubr.bf16.mxu0 0
    %1004 = vmatmul.mubr.bf16.gmra.mrb[0].mxu0 %v897
    %v1005 = vpop.f32.mrb[0].mxu0
    %v1006 = vadd.f32 0.0, %v1005
    %v1007 = vpop.f32.mrb[0].mxu0
    %v1008 = vpop.f32.mrb[0].mxu0
    %v1009 = vadd.f32 0.0, %v1008
    %v1010 = vpop.f32.mrb[0].mxu0
    %1011 = vdwg.mxu0
    %v1028 = vunpack.c.l.b16 %v868
    %v1029 = vunpack.c.l.b16 %v869
    %v1030 = vunpack.c.l.b16 %v870
    %v1031 = vunpack.c.l.b16 %v871
    %v1032 = vunpack.c.l.b16 %v872
    %v1033 = vunpack.c.l.b16 %v873
    %v1034 = vunpack.c.l.b16 %v874
    %v1035 = vunpack.c.l.b16 %v875
    %v1036 = vunpack.c.l.b16 %v876
    %v1037 = vunpack.c.l.b16 %v877
    %v1038 = vunpack.c.l.b16 %v878
    %v1039 = vunpack.c.l.b16 %v879
    %v1040 = vunpack.c.l.b16 %v880
    %v1041 = vunpack.c.l.b16 %v881
    %v1042 = vunpack.c.l.b16 %v882
    %v1043 = vunpack.c.l.b16 %v883
    %v1044 = vpack.c.b16 %v1029, %v1028
    %v1045 = vpack.c.b16 %v1031, %v1030
    %v1046 = vpack.c.b16 %v1033, %v1032
    %v1047 = vpack.c.b16 %v1035, %v1034
    %v1048 = vpack.c.b16 %v1037, %v1036
    %v1049 = vpack.c.b16 %v1039, %v1038
    %v1050 = vpack.c.b16 %v1041, %v1040
    %v1051 = vpack.c.b16 %v1043, %v1042
    %1060 = vmatprep.subr.bf16.mxu0 0
    %1061 = vmatpush1.bf16.msra.mxu0 %v1044
    %1062 = vmatprep.subr.bf16.mxu0 0
    %1063 = vmatpush1.bf16.msra.mxu0 %v1045
    %1064 = vmatprep.subr.bf16.mxu0 0
    %1065 = vmatpush1.bf16.msra.mxu0 %v1046
    %1066 = vmatprep.subr.bf16.mxu0 0
    %1067 = vmatpush1.bf16.msra.mxu0 %v1047
    %1068 = vmatprep.subr.bf16.mxu0 0
    %1069 = vmatpush1.bf16.msra.mxu0 %v1048
    %1070 = vmatprep.subr.bf16.mxu0 0
    %1071 = vmatpush1.bf16.msra.mxu0 %v1049
    %1072 = vmatprep.subr.bf16.mxu0 0
    %1073 = vmatpush1.bf16.msra.mxu0 %v1050
    %1074 = vmatprep.subr.bf16.mxu0 0
    %1075 = vmatpush1.bf16.msra.mxu0 %v1051
    %1076 = vmatprep.subr.bf16.mxu0 0
    %1077 = vmatpush1.bf16.msra.mxu0 0
    %1078 = vmatprep.subr.bf16.mxu0 0
    %1079 = vmatpush1.bf16.msra.mxu0 0
    %1080 = vmatprep.subr.bf16.mxu0 0
    %1081 = vmatpush1.bf16.msra.mxu0 0
    %1082 = vmatprep.subr.bf16.mxu0 0
    %1083 = vmatpush1.bf16.msra.mxu0 0
    %1084 = vmatprep.subr.bf16.mxu0 0
    %1085 = vmatpush1.bf16.msra.mxu0 0
    %1086 = vmatprep.subr.bf16.mxu0 0
    %1087 = vmatpush1.bf16.msra.mxu0 0
    %1088 = vmatprep.subr.bf16.mxu0 0
    %1089 = vmatpush1.bf16.msra.mxu0 0
    %1090 = vmatprep.subr.bf16.mxu0 0
    %1091 = vmatpush1.bf16.msra.mxu0 0
    %1092 = vmatprep.mubr.bf16.mxu0 0
    %1093 = vmatmul.mubr.bf16.gmra.mrb[0].mxu0 %v866
    %v1094 = vpop.f32.mrb[0].mxu0
    %v1095 = vadd.f32 %v998, %v1094
    %v1096 = vpop.f32.mrb[0].mxu0
    %v1097 = vpop.f32.mrb[0].mxu0
    %v1098 = vadd.f32 %v1001, %v1097
    %v1099 = vpop.f32.mrb[0].mxu0
    %1100 = vmatprep.mubr.bf16.mxu0 0
    %1101 = vmatmul.mubr.bf16.gmra.mrb[0].mxu0 %v867
    %v1102 = vpop.f32.mrb[0].mxu0
    %v1103 = vadd.f32 %v1006, %v1102
    %v1104 = vpop.f32.mrb[0].mxu0
    %v1105 = vpop.f32.mrb[0].mxu0
    %v1106 = vadd.f32 %v1009, %v1105
    %v1107 = vpop.f32.mrb[0].mxu0
    %1108 = vdwg.mxu0
    %v1109 = vpack.c.bf16 %v851, %v850
    %v1110 = vpack.c.bf16 %v853, %v852
    %s1111 = scalar_lea.vmem [#allocation7], 128
    %v1112 = vld [vmem:[%s1111] sm:$0xf]
    %v1113 = vld [vmem:[%s1111 + $0x4] sm:$0xf]
    %v1114 = vld [vmem:[%s1111 + $0x8] sm:$0xf]
    %v1115 = vld [vmem:[%s1111 + $0xc] sm:$0xf]
    %v1116 = vld [vmem:[%s1111 + $0x10] sm:$0xf]
    %v1117 = vld [vmem:[%s1111 + $0x14] sm:$0xf]
    %v1118 = vld [vmem:[%s1111 + $0x18] sm:$0xf]
    %v1119 = vld [vmem:[%s1111 + $0x1c] sm:$0xf]
    %v1120 = vld [vmem:[%s1111 + $0x20] sm:$0xf]
    %v1121 = vld [vmem:[%s1111 + $0x24] sm:$0xf]
    %v1122 = vld [vmem:[%s1111 + $0x28] sm:$0xf]
    %v1123 = vld [vmem:[%s1111 + $0x2c] sm:$0xf]
    %v1124 = vld [vmem:[%s1111 + $0x30] sm:$0xf]
    %v1125 = vld [vmem:[%s1111 + $0x34] sm:$0xf]
    %v1126 = vld [vmem:[%s1111 + $0x38] sm:$0xf]
    %v1127 = vld [vmem:[%s1111 + $0x3c] sm:$0xf]
    %v1144 = vunpack.c.l.b16 %v1112
    %v1145 = vunpack.c.l.b16 %v1113
    %v1146 = vunpack.c.l.b16 %v1114
    %v1147 = vunpack.c.l.b16 %v1115
    %v1148 = vunpack.c.l.b16 %v1116
    %v1149 = vunpack.c.l.b16 %v1117
    %v1150 = vunpack.c.l.b16 %v1118
    %v1151 = vunpack.c.l.b16 %v1119
    %v1152 = vunpack.c.l.b16 %v1120
    %v1153 = vunpack.c.l.b16 %v1121
    %v1154 = vunpack.c.l.b16 %v1122
    %v1155 = vunpack.c.l.b16 %v1123
    %v1156 = vunpack.c.l.b16 %v1124
    %v1157 = vunpack.c.l.b16 %v1125
    %v1158 = vunpack.c.l.b16 %v1126
    %v1159 = vunpack.c.l.b16 %v1127
    %v1160 = vpack.c.b16 %v1145, %v1144
    %v1161 = vpack.c.b16 %v1147, %v1146
    %v1162 = vpack.c.b16 %v1149, %v1148
    %v1163 = vpack.c.b16 %v1151, %v1150
    %v1164 = vpack.c.b16 %v1153, %v1152
    %v1165 = vpack.c.b16 %v1155, %v1154
    %v1166 = vpack.c.b16 %v1157, %v1156
    %v1167 = vpack.c.b16 %v1159, %v1158
    %1176 = vmatprep.subr.bf16.mxu0 0
    %1177 = vmatpush1.bf16.msra.mxu0 %v1160
    %1178 = vmatprep.subr.bf16.mxu0 0
    %1179 = vmatpush1.bf16.msra.mxu0 %v1161
    %1180 = vmatprep.subr.bf16.mxu0 0
    %1181 = vmatpush1.bf16.msra.mxu0 %v1162
    %1182 = vmatprep.subr.bf16.mxu0 0
    %1183 = vmatpush1.bf16.msra.mxu0 %v1163
    %1184 = vmatprep.subr.bf16.mxu0 0
    %1185 = vmatpush1.bf16.msra.mxu0 %v1164
    %1186 = vmatprep.subr.bf16.mxu0 0
    %1187 = vmatpush1.bf16.msra.mxu0 %v1165
    %1188 = vmatprep.subr.bf16.mxu0 0
    %1189 = vmatpush1.bf16.msra.mxu0 %v1166
    %1190 = vmatprep.subr.bf16.mxu0 0
    %1191 = vmatpush1.bf16.msra.mxu0 %v1167
    %1192 = vmatprep.subr.bf16.mxu0 0
    %1193 = vmatpush1.bf16.msra.mxu0 0
    %1194 = vmatprep.subr.bf16.mxu0 0
    %1195 = vmatpush1.bf16.msra.mxu0 0
    %1196 = vmatprep.subr.bf16.mxu0 0
    %1197 = vmatpush1.bf16.msra.mxu0 0
    %1198 = vmatprep.subr.bf16.mxu0 0
    %1199 = vmatpush1.bf16.msra.mxu0 0
    %1200 = vmatprep.subr.bf16.mxu0 0
    %1201 = vmatpush1.bf16.msra.mxu0 0
    %1202 = vmatprep.subr.bf16.mxu0 0
    %1203 = vmatpush1.bf16.msra.mxu0 0
    %1204 = vmatprep.subr.bf16.mxu0 0
    %1205 = vmatpush1.bf16.msra.mxu0 0
    %1206 = vmatprep.subr.bf16.mxu0 0
    %1207 = vmatpush1.bf16.msra.mxu0 0
    %1208 = vmatprep.mubr.bf16.mxu0 0
    %1209 = vmatmul.mubr.bf16.gmra.mrb[0].mxu0 %v1109
    %v1210 = vpop.f32.mrb[0].mxu0
    %v1211 = vadd.f32 0.0, %v1210
    %v1212 = vpop.f32.mrb[0].mxu0
    %v1213 = vpop.f32.mrb[0].mxu0
    %v1214 = vadd.f32 0.0, %v1213
    %v1215 = vpop.f32.mrb[0].mxu0
    %1216 = vmatprep.mubr.bf16.mxu0 0
    %1217 = vmatmul.mubr.bf16.gmra.mrb[0].mxu0 %v1110
    %v1218 = vpop.f32.mrb[0].mxu0
    %v1219 = vadd.f32 0.0, %v1218
    %v1220 = vpop.f32.mrb[0].mxu0
    %v1221 = vpop.f32.mrb[0].mxu0
    %v1222 = vadd.f32 0.0, %v1221
    %v1223 = vpop.f32.mrb[0].mxu0
    %1224 = vdwg.mxu0
    %v1225 = vadd.f32 %v1095, %v1211
    %v1226 = vadd.f32 %v1098, %v1214
    %v1227 = vadd.f32 %v1103, %v1219
    %v1228 = vadd.f32 %v1106, %v1222
    %v1229 = vrot.slane %v850, 1
    %v1230 = vrot.slane %v851, 1
    %v1231 = vrot.slane %v852, 1
    %v1232 = vrot.slane %v853, 1
    %v1233 = vsel %vm550, %v1231, %v1232
    %v1234 = vsel %vm550, %v1230, %v1231
    %v1235 = vsel %vm550, %v1229, %v1230
    %v1236 = vsel %vm550, %v1232, %v1229
    %v1237 = vsel %vm559, %v1235, 0.0
    %v1238 = vsel %vm560, %v1234, 0.0
    %v1239 = vsel %vm561, %v1233, 0.0
    %v1240 = vsel %vm562, %v1236, 0.0
    %v1241 = vpack.c.bf16 %v1238, %v1237
    %v1242 = vpack.c.bf16 %v1240, %v1239
    %s1243 = scalar_lea.vmem [#allocation7], 192
    %v1244 = vld [vmem:[%s1243] sm:$0xf]
    %v1245 = vld [vmem:[%s1243 + $0x4] sm:$0xf]
    %v1246 = vld [vmem:[%s1243 + $0x8] sm:$0xf]
    %v1247 = vld [vmem:[%s1243 + $0xc] sm:$0xf]
    %v1248 = vld [vmem:[%s1243 + $0x10] sm:$0xf]
    %v1249 = vld [vmem:[%s1243 + $0x14] sm:$0xf]
    %v1250 = vld [vmem:[%s1243 + $0x18] sm:$0xf]
    %v1251 = vld [vmem:[%s1243 + $0x1c] sm:$0xf]
    %v1252 = vld [vmem:[%s1243 + $0x20] sm:$0xf]
    %v1253 = vld [vmem:[%s1243 + $0x24] sm:$0xf]
    %v1254 = vld [vmem:[%s1243 + $0x28] sm:$0xf]
    %v1255 = vld [vmem:[%s1243 + $0x2c] sm:$0xf]
    %v1256 = vld [vmem:[%s1243 + $0x30] sm:$0xf]
    %v1257 = vld [vmem:[%s1243 + $0x34] sm:$0xf]
    %v1258 = vld [vmem:[%s1243 + $0x38] sm:$0xf]
    %v1259 = vld [vmem:[%s1243 + $0x3c] sm:$0xf]
    %v1276 = vunpack.c.l.b16 %v1244
    %v1277 = vunpack.c.l.b16 %v1245
    %v1278 = vunpack.c.l.b16 %v1246
    %v1279 = vunpack.c.l.b16 %v1247
    %v1280 = vunpack.c.l.b16 %v1248
    %v1281 = vunpack.c.l.b16 %v1249
    %v1282 = vunpack.c.l.b16 %v1250
    %v1283 = vunpack.c.l.b16 %v1251
    %v1284 = vunpack.c.l.b16 %v1252
    %v1285 = vunpack.c.l.b16 %v1253
    %v1286 = vunpack.c.l.b16 %v1254
    %v1287 = vunpack.c.l.b16 %v1255
    %v1288 = vunpack.c.l.b16 %v1256
    %v1289 = vunpack.c.l.b16 %v1257
    %v1290 = vunpack.c.l.b16 %v1258
    %v1291 = vunpack.c.l.b16 %v1259
    %v1292 = vpack.c.b16 %v1277, %v1276
    %v1293 = vpack.c.b16 %v1279, %v1278
    %v1294 = vpack.c.b16 %v1281, %v1280
    %v1295 = vpack.c.b16 %v1283, %v1282
    %v1296 = vpack.c.b16 %v1285, %v1284
    %v1297 = vpack.c.b16 %v1287, %v1286
    %v1298 = vpack.c.b16 %v1289, %v1288
    %v1299 = vpack.c.b16 %v1291, %v1290
    %1308 = vmatprep.subr.bf16.mxu0 0
    %1309 = vmatpush1.bf16.msra.mxu0 %v1292
    %1310 = vmatprep.subr.bf16.mxu0 0
    %1311 = vmatpush1.bf16.msra.mxu0 %v1293
    %1312 = vmatprep.subr.bf16.mxu0 0
    %1313 = vmatpush1.bf16.msra.mxu0 %v1294
    %1314 = vmatprep.subr.bf16.mxu0 0
    %1315 = vmatpush1.bf16.msra.mxu0 %v1295
    %1316 = vmatprep.subr.bf16.mxu0 0
    %1317 = vmatpush1.bf16.msra.mxu0 %v1296
    %1318 = vmatprep.subr.bf16.mxu0 0
    %1319 = vmatpush1.bf16.msra.mxu0 %v1297
    %1320 = vmatprep.subr.bf16.mxu0 0
    %1321 = vmatpush1.bf16.msra.mxu0 %v1298
    %1322 = vmatprep.subr.bf16.mxu0 0
    %1323 = vmatpush1.bf16.msra.mxu0 %v1299
    %1324 = vmatprep.subr.bf16.mxu0 0
    %1325 = vmatpush1.bf16.msra.mxu0 0
    %1326 = vmatprep.subr.bf16.mxu0 0
    %1327 = vmatpush1.bf16.msra.mxu0 0
    %1328 = vmatprep.subr.bf16.mxu0 0
    %1329 = vmatpush1.bf16.msra.mxu0 0
    %1330 = vmatprep.subr.bf16.mxu0 0
    %1331 = vmatpush1.bf16.msra.mxu0 0
    %1332 = vmatprep.subr.bf16.mxu0 0
    %1333 = vmatpush1.bf16.msra.mxu0 0
    %1334 = vmatprep.subr.bf16.mxu0 0
    %1335 = vmatpush1.bf16.msra.mxu0 0
    %1336 = vmatprep.subr.bf16.mxu0 0
    %1337 = vmatpush1.bf16.msra.mxu0 0
    %1338 = vmatprep.subr.bf16.mxu0 0
    %1339 = vmatpush1.bf16.msra.mxu0 0
    %1340 = vmatprep.mubr.bf16.mxu0 0
    %1341 = vmatmul.mubr.bf16.gmra.mrb[0].mxu0 %v1241
    %v1342 = vpop.f32.mrb[0].mxu0
    %v1343 = vadd.f32 0.0, %v1342
    %v1344 = vpop.f32.mrb[0].mxu0
    %v1345 = vpop.f32.mrb[0].mxu0
    %v1346 = vadd.f32 0.0, %v1345
    %v1347 = vpop.f32.mrb[0].mxu0
    %1348 = vmatprep.mubr.bf16.mxu0 0
    %1349 = vmatmul.mubr.bf16.gmra.mrb[0].mxu0 %v1242
    %v1350 = vpop.f32.mrb[0].mxu0
    %v1351 = vadd.f32 0.0, %v1350
    %v1352 = vpop.f32.mrb[0].mxu0
    %v1353 = vpop.f32.mrb[0].mxu0
    %v1354 = vadd.f32 0.0, %v1353
    %v1355 = vpop.f32.mrb[0].mxu0
    %1356 = vdwg.mxu0
    %v1357 = vadd.f32 %v1225, %v1343
    %v1358 = vadd.f32 %v1226, %v1346
    %v1359 = vadd.f32 %v1227, %v1351
    %v1360 = vadd.f32 %v1228, %v1354
    %v1361 = vrot.slane %v850, 2
    %v1362 = vrot.slane %v851, 2
    %v1363 = vrot.slane %v852, 2
    %v1364 = vrot.slane %v853, 2
    %v1365 = vsel %vm691, %v1363, %v1364
    %v1366 = vsel %vm691, %v1362, %v1363
    %v1367 = vsel %vm691, %v1361, %v1362
    %v1368 = vsel %vm691, %v1364, %v1361
    %v1369 = vsel %vm700, %v1367, 0.0
    %v1370 = vsel %vm701, %v1366, 0.0
    %v1371 = vsel %vm702, %v1365, 0.0
    %v1372 = vsel %vm703, %v1368, 0.0
    %v1373 = vpack.c.bf16 %v1370, %v1369
    %v1374 = vpack.c.bf16 %v1372, %v1371
    %s1375 = scalar_lea.vmem [#allocation7], 256
    %v1376 = vld [vmem:[%s1375] sm:$0xf]
    %v1377 = vld [vmem:[%s1375 + $0x4] sm:$0xf]
    %v1378 = vld [vmem:[%s1375 + $0x8] sm:$0xf]
    %v1379 = vld [vmem:[%s1375 + $0xc] sm:$0xf]
    %v1380 = vld [vmem:[%s1375 + $0x10] sm:$0xf]
    %v1381 = vld [vmem:[%s1375 + $0x14] sm:$0xf]
    %v1382 = vld [vmem:[%s1375 + $0x18] sm:$0xf]
    %v1383 = vld [vmem:[%s1375 + $0x1c] sm:$0xf]
    %v1384 = vld [vmem:[%s1375 + $0x20] sm:$0xf]
    %v1385 = vld [vmem:[%s1375 + $0x24] sm:$0xf]
    %v1386 = vld [vmem:[%s1375 + $0x28] sm:$0xf]
    %v1387 = vld [vmem:[%s1375 + $0x2c] sm:$0xf]
    %v1388 = vld [vmem:[%s1375 + $0x30] sm:$0xf]
    %v1389 = vld [vmem:[%s1375 + $0x34] sm:$0xf]
    %v1390 = vld [vmem:[%s1375 + $0x38] sm:$0xf]
    %v1391 = vld [vmem:[%s1375 + $0x3c] sm:$0xf]
    %v1408 = vunpack.c.l.b16 %v1376
    %v1409 = vunpack.c.l.b16 %v1377
    %v1410 = vunpack.c.l.b16 %v1378
    %v1411 = vunpack.c.l.b16 %v1379
    %v1412 = vunpack.c.l.b16 %v1380
    %v1413 = vunpack.c.l.b16 %v1381
    %v1414 = vunpack.c.l.b16 %v1382
    %v1415 = vunpack.c.l.b16 %v1383
    %v1416 = vunpack.c.l.b16 %v1384
    %v1417 = vunpack.c.l.b16 %v1385
    %v1418 = vunpack.c.l.b16 %v1386
    %v1419 = vunpack.c.l.b16 %v1387
    %v1420 = vunpack.c.l.b16 %v1388
    %v1421 = vunpack.c.l.b16 %v1389
    %v1422 = vunpack.c.l.b16 %v1390
    %v1423 = vunpack.c.l.b16 %v1391
    %v1424 = vpack.c.b16 %v1409, %v1408
    %v1425 = vpack.c.b16 %v1411, %v1410
    %v1426 = vpack.c.b16 %v1413, %v1412
    %v1427 = vpack.c.b16 %v1415, %v1414
    %v1428 = vpack.c.b16 %v1417, %v1416
    %v1429 = vpack.c.b16 %v1419, %v1418
    %v1430 = vpack.c.b16 %v1421, %v1420
    %v1431 = vpack.c.b16 %v1423, %v1422
    %1440 = vmatprep.subr.bf16.mxu0 0
    %1441 = vmatpush1.bf16.msra.mxu0 %v1424
    %1442 = vmatprep.subr.bf16.mxu0 0
    %1443 = vmatpush1.bf16.msra.mxu0 %v1425
    %1444 = vmatprep.subr.bf16.mxu0 0
    %1445 = vmatpush1.bf16.msra.mxu0 %v1426
    %1446 = vmatprep.subr.bf16.mxu0 0
    %1447 = vmatpush1.bf16.msra.mxu0 %v1427
    %1448 = vmatprep.subr.bf16.mxu0 0
    %1449 = vmatpush1.bf16.msra.mxu0 %v1428
    %1450 = vmatprep.subr.bf16.mxu0 0
    %1451 = vmatpush1.bf16.msra.mxu0 %v1429
    %1452 = vmatprep.subr.bf16.mxu0 0
    %1453 = vmatpush1.bf16.msra.mxu0 %v1430
    %1454 = vmatprep.subr.bf16.mxu0 0
    %1455 = vmatpush1.bf16.msra.mxu0 %v1431
    %1456 = vmatprep.subr.bf16.mxu0 0
    %1457 = vmatpush1.bf16.msra.mxu0 0
    %1458 = vmatprep.subr.bf16.mxu0 0
    %1459 = vmatpush1.bf16.msra.mxu0 0
    %1460 = vmatprep.subr.bf16.mxu0 0
    %1461 = vmatpush1.bf16.msra.mxu0 0
    %1462 = vmatprep.subr.bf16.mxu0 0
    %1463 = vmatpush1.bf16.msra.mxu0 0
    %1464 = vmatprep.subr.bf16.mxu0 0
    %1465 = vmatpush1.bf16.msra.mxu0 0
    %1466 = vmatprep.subr.bf16.mxu0 0
    %1467 = vmatpush1.bf16.msra.mxu0 0
    %1468 = vmatprep.subr.bf16.mxu0 0
    %1469 = vmatpush1.bf16.msra.mxu0 0
    %1470 = vmatprep.subr.bf16.mxu0 0
    %1471 = vmatpush1.bf16.msra.mxu0 0
    %1472 = vmatprep.mubr.bf16.mxu0 0
    %1473 = vmatmul.mubr.bf16.gmra.mrb[0].mxu0 %v1373
    %v1474 = vpop.f32.mrb[0].mxu0
    %v1475 = vadd.f32 0.0, %v1474
    %v1476 = vpop.f32.mrb[0].mxu0
    %v1477 = vpop.f32.mrb[0].mxu0
    %v1478 = vadd.f32 0.0, %v1477
    %v1479 = vpop.f32.mrb[0].mxu0
    %1480 = vmatprep.mubr.bf16.mxu0 0
    %1481 = vmatmul.mubr.bf16.gmra.mrb[0].mxu0 %v1374
    %v1482 = vpop.f32.mrb[0].mxu0
    %v1483 = vadd.f32 0.0, %v1482
    %v1484 = vpop.f32.mrb[0].mxu0
    %v1485 = vpop.f32.mrb[0].mxu0
    %v1486 = vadd.f32 0.0, %v1485
    %v1487 = vpop.f32.mrb[0].mxu0
    %1488 = vdwg.mxu0
    %v1489 = vadd.f32 %v1357, %v1475
    %v1490 = vadd.f32 %v1358, %v1478
    %v1491 = vadd.f32 %v1359, %v1483
    %v1492 = vadd.f32 %v1360, %v1486
    %s1493 = scalar_lea.vmem %s4, 1
    %v1494 = vld [vmem:[%s1493] sm:$0x1]
    %v1496 = vlaneseq
    %v1497 = vshrl.u32 %v1496, 7
    %v1498 = vsub.s32 0, %v1497
    %v1499 = vrot.slane %v1494, %v1498
    %v1501 = vmul.f32 %v1489, %v1499
    %v1502 = vmul.f32 %v1490, %v1499
    %v1503 = vmul.f32 %v1491, %v1499
    %v1504 = vmul.f32 %v1492, %v1499
    %s1505 = scalar_lea.vmem %s5, 1
    %v1506 = vld [vmem:[%s1505] sm:$0x1]
    %v1508 = vlaneseq
    %v1509 = vshrl.u32 %v1508, 7
    %v1510 = vsub.s32 0, %v1509
    %v1511 = vrot.slane %v1506, %v1510
    %v1513 = vadd.f32 %v1501, %v1511
    %v1514 = vadd.f32 %v1502, %v1511
    %v1515 = vadd.f32 %v1503, %v1511
    %v1516 = vadd.f32 %v1504, %v1511
    %v1517 = vmax.f32 %v1513, 0.0
    %v1518 = vmax.f32 %v1514, 0.0
    %v1519 = vmax.f32 %v1515, 0.0
    %v1520 = vmax.f32 %v1516, 0.0
    %v1521 = vrot.slane %v1517, 6
    %v1522 = vrot.slane %v1518, 6
    %v1523 = vrot.slane %v1519, 6
    %v1524 = vrot.slane %v1520, 6
    %v1525 = vsel %vm157, %v1523, %v1524
    %v1526 = vsel %vm157, %v1522, %v1523
    %v1527 = vsel %vm157, %v1521, %v1522
    %v1528 = vsel %vm157, %v1524, %v1521
    %v1529 = vsel %vm166, %v1528, 0.0
    %v1530 = vsel %vm167, %v1527, 0.0
    %v1531 = vsel %vm168, %v1526, 0.0
    %v1532 = vsel %vm169, %v1525, 0.0
    %v1533 = vpack.c.bf16 %v1530, %v1529
    %v1534 = vpack.c.bf16 %v1532, %v1531
    %v1535 = vld [vmem:[#allocation8] sm:$0xf]
    %v1536 = vld [vmem:[#allocation8 + $0x4] sm:$0xf]
    %v1537 = vld [vmem:[#allocation8 + $0x8] sm:$0xf]
    %v1538 = vld [vmem:[#allocation8 + $0xc] sm:$0xf]
    %v1539 = vld [vmem:[#allocation8 + $0x10] sm:$0xf]
    %v1540 = vld [vmem:[#allocation8 + $0x14] sm:$0xf]
    %v1541 = vld [vmem:[#allocation8 + $0x18] sm:$0xf]
    %v1542 = vld [vmem:[#allocation8 + $0x1c] sm:$0xf]
    %v1543 = vld [vmem:[#allocation8 + $0x20] sm:$0xf]
    %v1544 = vld [vmem:[#allocation8 + $0x24] sm:$0xf]
    %v1545 = vld [vmem:[#allocation8 + $0x28] sm:$0xf]
    %v1546 = vld [vmem:[#allocation8 + $0x2c] sm:$0xf]
    %v1547 = vld [vmem:[#allocation8 + $0x30] sm:$0xf]
    %v1548 = vld [vmem:[#allocation8 + $0x34] sm:$0xf]
    %v1549 = vld [vmem:[#allocation8 + $0x38] sm:$0xf]
    %v1550 = vld [vmem:[#allocation8 + $0x3c] sm:$0xf]
    %v1551 = vrot.slane %v1517, 7
    %v1552 = vrot.slane %v1518, 7
    %v1553 = vrot.slane %v1519, 7
    %v1554 = vrot.slane %v1520, 7
    %v1555 = vsel %vm196, %v1553, %v1554
    %v1556 = vsel %vm196, %v1552, %v1553
    %v1557 = vsel %vm196, %v1551, %v1552
    %v1558 = vsel %vm196, %v1554, %v1551
    %v1559 = vsel %vm205, %v1558, 0.0
    %v1560 = vsel %vm206, %v1557, 0.0
    %v1561 = vsel %vm207, %v1556, 0.0
    %v1562 = vsel %vm208, %v1555, 0.0
    %v1563 = vpack.c.bf16 %v1560, %v1559
    %v1564 = vpack.c.bf16 %v1562, %v1561
    %s1565 = scalar_lea.vmem [#allocation8], 64
    %v1566 = vld [vmem:[%s1565] sm:$0xf]
    %v1567 = vld [vmem:[%s1565 + $0x4] sm:$0xf]
    %v1568 = vld [vmem:[%s1565 + $0x8] sm:$0xf]
    %v1569 = vld [vmem:[%s1565 + $0xc] sm:$0xf]
    %v1570 = vld [vmem:[%s1565 + $0x10] sm:$0xf]
    %v1571 = vld [vmem:[%s1565 + $0x14] sm:$0xf]
    %v1572 = vld [vmem:[%s1565 + $0x18] sm:$0xf]
    %v1573 = vld [vmem:[%s1565 + $0x1c] sm:$0xf]
    %v1574 = vld [vmem:[%s1565 + $0x20] sm:$0xf]
    %v1575 = vld [vmem:[%s1565 + $0x24] sm:$0xf]
    %v1576 = vld [vmem:[%s1565 + $0x28] sm:$0xf]
    %v1577 = vld [vmem:[%s1565 + $0x2c] sm:$0xf]
    %v1578 = vld [vmem:[%s1565 + $0x30] sm:$0xf]
    %v1579 = vld [vmem:[%s1565 + $0x34] sm:$0xf]
    %v1580 = vld [vmem:[%s1565 + $0x38] sm:$0xf]
    %v1581 = vld [vmem:[%s1565 + $0x3c] sm:$0xf]
    %v1598 = vunpack.c.l.b16 %v1566
    %v1599 = vunpack.c.l.b16 %v1567
    %v1600 = vunpack.c.l.b16 %v1568
    %v1601 = vunpack.c.l.b16 %v1569
    %v1602 = vunpack.c.l.b16 %v1570
    %v1603 = vunpack.c.l.b16 %v1571
    %v1604 = vunpack.c.l.b16 %v1572
    %v1605 = vunpack.c.l.b16 %v1573
    %v1606 = vunpack.c.l.b16 %v1574
    %v1607 = vunpack.c.l.b16 %v1575
    %v1608 = vunpack.c.l.b16 %v1576
    %v1609 = vunpack.c.l.b16 %v1577
    %v1610 = vunpack.c.l.b16 %v1578
    %v1611 = vunpack.c.l.b16 %v1579
    %v1612 = vunpack.c.l.b16 %v1580
    %v1613 = vunpack.c.l.b16 %v1581
    %v1614 = vpack.c.b16 %v1599, %v1598
    %v1615 = vpack.c.b16 %v1601, %v1600
    %v1616 = vpack.c.b16 %v1603, %v1602
    %v1617 = vpack.c.b16 %v1605, %v1604
    %v1618 = vpack.c.b16 %v1607, %v1606
    %v1619 = vpack.c.b16 %v1609, %v1608
    %v1620 = vpack.c.b16 %v1611, %v1610
    %v1621 = vpack.c.b16 %v1613, %v1612
    %1630 = vmatprep.subr.bf16.mxu0 0
    %1631 = vmatpush1.bf16.msra.mxu0 %v1614
    %1632 = vmatprep.subr.bf16.mxu0 0
    %1633 = vmatpush1.bf16.msra.mxu0 %v1615
    %1634 = vmatprep.subr.bf16.mxu0 0
    %1635 = vmatpush1.bf16.msra.mxu0 %v1616
    %1636 = vmatprep.subr.bf16.mxu0 0
    %1637 = vmatpush1.bf16.msra.mxu0 %v1617
    %1638 = vmatprep.subr.bf16.mxu0 0
    %1639 = vmatpush1.bf16.msra.mxu0 %v1618
    %1640 = vmatprep.subr.bf16.mxu0 0
    %1641 = vmatpush1.bf16.msra.mxu0 %v1619
    %1642 = vmatprep.subr.bf16.mxu0 0
    %1643 = vmatpush1.bf16.msra.mxu0 %v1620
    %1644 = vmatprep.subr.bf16.mxu0 0
    %1645 = vmatpush1.bf16.msra.mxu0 %v1621
    %1646 = vmatprep.subr.bf16.mxu0 0
    %1647 = vmatpush1.bf16.msra.mxu0 0
    %1648 = vmatprep.subr.bf16.mxu0 0
    %1649 = vmatpush1.bf16.msra.mxu0 0
    %1650 = vmatprep.subr.bf16.mxu0 0
    %1651 = vmatpush1.bf16.msra.mxu0 0
    %1652 = vmatprep.subr.bf16.mxu0 0
    %1653 = vmatpush1.bf16.msra.mxu0 0
    %1654 = vmatprep.subr.bf16.mxu0 0
    %1655 = vmatpush1.bf16.msra.mxu0 0
    %1656 = vmatprep.subr.bf16.mxu0 0
    %1657 = vmatpush1.bf16.msra.mxu0 0
    %1658 = vmatprep.subr.bf16.mxu0 0
    %1659 = vmatpush1.bf16.msra.mxu0 0
    %1660 = vmatprep.subr.bf16.mxu0 0
    %1661 = vmatpush1.bf16.msra.mxu0 0
    %1662 = vmatprep.mubr.bf16.mxu0 0
    %1663 = vmatmul.mubr.bf16.gmra.mrb[0].mxu0 %v1563
    %v1664 = vpop.f32.mrb[0].mxu0
    %v1665 = vadd.f32 0.0, %v1664
    %v1666 = vpop.f32.mrb[0].mxu0
    %v1667 = vpop.f32.mrb[0].mxu0
    %v1668 = vadd.f32 0.0, %v1667
    %v1669 = vpop.f32.mrb[0].mxu0
    %1670 = vmatprep.mubr.bf16.mxu0 0
    %1671 = vmatmul.mubr.bf16.gmra.mrb[0].mxu0 %v1564
    %v1672 = vpop.f32.mrb[0].mxu0
    %v1673 = vadd.f32 0.0, %v1672
    %v1674 = vpop.f32.mrb[0].mxu0
    %v1675 = vpop.f32.mrb[0].mxu0
    %v1676 = vadd.f32 0.0, %v1675
    %v1677 = vpop.f32.mrb[0].mxu0
    %1678 = vdwg.mxu0
    %v1695 = vunpack.c.l.b16 %v1535
    %v1696 = vunpack.c.l.b16 %v1536
    %v1697 = vunpack.c.l.b16 %v1537
    %v1698 = vunpack.c.l.b16 %v1538
    %v1699 = vunpack.c.l.b16 %v1539
    %v1700 = vunpack.c.l.b16 %v1540
    %v1701 = vunpack.c.l.b16 %v1541
    %v1702 = vunpack.c.l.b16 %v1542
    %v1703 = vunpack.c.l.b16 %v1543
    %v1704 = vunpack.c.l.b16 %v1544
    %v1705 = vunpack.c.l.b16 %v1545
    %v1706 = vunpack.c.l.b16 %v1546
    %v1707 = vunpack.c.l.b16 %v1547
    %v1708 = vunpack.c.l.b16 %v1548
    %v1709 = vunpack.c.l.b16 %v1549
    %v1710 = vunpack.c.l.b16 %v1550
    %v1711 = vpack.c.b16 %v1696, %v1695
    %v1712 = vpack.c.b16 %v1698, %v1697
    %v1713 = vpack.c.b16 %v1700, %v1699
    %v1714 = vpack.c.b16 %v1702, %v1701
    %v1715 = vpack.c.b16 %v1704, %v1703
    %v1716 = vpack.c.b16 %v1706, %v1705
    %v1717 = vpack.c.b16 %v1708, %v1707
    %v1718 = vpack.c.b16 %v1710, %v1709
    %1727 = vmatprep.subr.bf16.mxu0 0
    %1728 = vmatpush1.bf16.msra.mxu0 %v1711
    %1729 = vmatprep.subr.bf16.mxu0 0
    %1730 = vmatpush1.bf16.msra.mxu0 %v1712
    %1731 = vmatprep.subr.bf16.mxu0 0
    %1732 = vmatpush1.bf16.msra.mxu0 %v1713
    %1733 = vmatprep.subr.bf16.mxu0 0
    %1734 = vmatpush1.bf16.msra.mxu0 %v1714
    %1735 = vmatprep.subr.bf16.mxu0 0
    %1736 = vmatpush1.bf16.msra.mxu0 %v1715
    %1737 = vmatprep.subr.bf16.mxu0 0
    %1738 = vmatpush1.bf16.msra.mxu0 %v1716
    %1739 = vmatprep.subr.bf16.mxu0 0
    %1740 = vmatpush1.bf16.msra.mxu0 %v1717
    %1741 = vmatprep.subr.bf16.mxu0 0
    %1742 = vmatpush1.bf16.msra.mxu0 %v1718
    %1743 = vmatprep.subr.bf16.mxu0 0
    %1744 = vmatpush1.bf16.msra.mxu0 0
    %1745 = vmatprep.subr.bf16.mxu0 0
    %1746 = vmatpush1.bf16.msra.mxu0 0
    %1747 = vmatprep.subr.bf16.mxu0 0
    %1748 = vmatpush1.bf16.msra.mxu0 0
    %1749 = vmatprep.subr.bf16.mxu0 0
    %1750 = vmatpush1.bf16.msra.mxu0 0
    %1751 = vmatprep.subr.bf16.mxu0 0
    %1752 = vmatpush1.bf16.msra.mxu0 0
    %1753 = vmatprep.subr.bf16.mxu0 0
    %1754 = vmatpush1.bf16.msra.mxu0 0
    %1755 = vmatprep.subr.bf16.mxu0 0
    %1756 = vmatpush1.bf16.msra.mxu0 0
    %1757 = vmatprep.subr.bf16.mxu0 0
    %1758 = vmatpush1.bf16.msra.mxu0 0
    %1759 = vmatprep.mubr.bf16.mxu0 0
    %1760 = vmatmul.mubr.bf16.gmra.mrb[0].mxu0 %v1533
    %v1761 = vpop.f32.mrb[0].mxu0
    %v1762 = vadd.f32 %v1665, %v1761
    %v1763 = vpop.f32.mrb[0].mxu0
    %v1764 = vpop.f32.mrb[0].mxu0
    %v1765 = vadd.f32 %v1668, %v1764
    %v1766 = vpop.f32.mrb[0].mxu0
    %1767 = vmatprep.mubr.bf16.mxu0 0
    %1768 = vmatmul.mubr.bf16.gmra.mrb[0].mxu0 %v1534
    %v1769 = vpop.f32.mrb[0].mxu0
    %v1770 = vadd.f32 %v1673, %v1769
    %v1771 = vpop.f32.mrb[0].mxu0
    %v1772 = vpop.f32.mrb[0].mxu0
    %v1773 = vadd.f32 %v1676, %v1772
    %v1774 = vpop.f32.mrb[0].mxu0
    %1775 = vdwg.mxu0
    %v1776 = vpack.c.bf16 %v1518, %v1517
    %v1777 = vpack.c.bf16 %v1520, %v1519
    %s1778 = scalar_lea.vmem [#allocation8], 128
    %v1779 = vld [vmem:[%s1778] sm:$0xf]
    %v1780 = vld [vmem:[%s1778 + $0x4] sm:$0xf]
    %v1781 = vld [vmem:[%s1778 + $0x8] sm:$0xf]
    %v1782 = vld [vmem:[%s1778 + $0xc] sm:$0xf]
    %v1783 = vld [vmem:[%s1778 + $0x10] sm:$0xf]
    %v1784 = vld [vmem:[%s1778 + $0x14] sm:$0xf]
    %v1785 = vld [vmem:[%s1778 + $0x18] sm:$0xf]
    %v1786 = vld [vmem:[%s1778 + $0x1c] sm:$0xf]
    %v1787 = vld [vmem:[%s1778 + $0x20] sm:$0xf]
    %v1788 = vld [vmem:[%s1778 + $0x24] sm:$0xf]
    %v1789 = vld [vmem:[%s1778 + $0x28] sm:$0xf]
    %v1790 = vld [vmem:[%s1778 + $0x2c] sm:$0xf]
    %v1791 = vld [vmem:[%s1778 + $0x30] sm:$0xf]
    %v1792 = vld [vmem:[%s1778 + $0x34] sm:$0xf]
    %v1793 = vld [vmem:[%s1778 + $0x38] sm:$0xf]
    %v1794 = vld [vmem:[%s1778 + $0x3c] sm:$0xf]
    %v1811 = vunpack.c.l.b16 %v1779
    %v1812 = vunpack.c.l.b16 %v1780
    %v1813 = vunpack.c.l.b16 %v1781
    %v1814 = vunpack.c.l.b16 %v1782
    %v1815 = vunpack.c.l.b16 %v1783
    %v1816 = vunpack.c.l.b16 %v1784
    %v1817 = vunpack.c.l.b16 %v1785
    %v1818 = vunpack.c.l.b16 %v1786
    %v1819 = vunpack.c.l.b16 %v1787
    %v1820 = vunpack.c.l.b16 %v1788
    %v1821 = vunpack.c.l.b16 %v1789
    %v1822 = vunpack.c.l.b16 %v1790
    %v1823 = vunpack.c.l.b16 %v1791
    %v1824 = vunpack.c.l.b16 %v1792
    %v1825 = vunpack.c.l.b16 %v1793
    %v1826 = vunpack.c.l.b16 %v1794
    %v1827 = vpack.c.b16 %v1812, %v1811
    %v1828 = vpack.c.b16 %v1814, %v1813
    %v1829 = vpack.c.b16 %v1816, %v1815
    %v1830 = vpack.c.b16 %v1818, %v1817
    %v1831 = vpack.c.b16 %v1820, %v1819
    %v1832 = vpack.c.b16 %v1822, %v1821
    %v1833 = vpack.c.b16 %v1824, %v1823
    %v1834 = vpack.c.b16 %v1826, %v1825
    %1843 = vmatprep.subr.bf16.mxu0 0
    %1844 = vmatpush1.bf16.msra.mxu0 %v1827
    %1845 = vmatprep.subr.bf16.mxu0 0
    %1846 = vmatpush1.bf16.msra.mxu0 %v1828
    %1847 = vmatprep.subr.bf16.mxu0 0
    %1848 = vmatpush1.bf16.msra.mxu0 %v1829
    %1849 = vmatprep.subr.bf16.mxu0 0
    %1850 = vmatpush1.bf16.msra.mxu0 %v1830
    %1851 = vmatprep.subr.bf16.mxu0 0
    %1852 = vmatpush1.bf16.msra.mxu0 %v1831
    %1853 = vmatprep.subr.bf16.mxu0 0
    %1854 = vmatpush1.bf16.msra.mxu0 %v1832
    %1855 = vmatprep.subr.bf16.mxu0 0
    %1856 = vmatpush1.bf16.msra.mxu0 %v1833
    %1857 = vmatprep.subr.bf16.mxu0 0
    %1858 = vmatpush1.bf16.msra.mxu0 %v1834
    %1859 = vmatprep.subr.bf16.mxu0 0
    %1860 = vmatpush1.bf16.msra.mxu0 0
    %1861 = vmatprep.subr.bf16.mxu0 0
    %1862 = vmatpush1.bf16.msra.mxu0 0
    %1863 = vmatprep.subr.bf16.mxu0 0
    %1864 = vmatpush1.bf16.msra.mxu0 0
    %1865 = vmatprep.subr.bf16.mxu0 0
    %1866 = vmatpush1.bf16.msra.mxu0 0
    %1867 = vmatprep.subr.bf16.mxu0 0
    %1868 = vmatpush1.bf16.msra.mxu0 0
    %1869 = vmatprep.subr.bf16.mxu0 0
    %1870 = vmatpush1.bf16.msra.mxu0 0
    %1871 = vmatprep.subr.bf16.mxu0 0
    %1872 = vmatpush1.bf16.msra.mxu0 0
    %1873 = vmatprep.subr.bf16.mxu0 0
    %1874 = vmatpush1.bf16.msra.mxu0 0
    %1875 = vmatprep.mubr.bf16.mxu0 0
    %1876 = vmatmul.mubr.bf16.gmra.mrb[0].mxu0 %v1776
    %v1877 = vpop.f32.mrb[0].mxu0
    %v1878 = vadd.f32 0.0, %v1877
    %v1879 = vpop.f32.mrb[0].mxu0
    %v1880 = vpop.f32.mrb[0].mxu0
    %v1881 = vadd.f32 0.0, %v1880
    %v1882 = vpop.f32.mrb[0].mxu0
    %1883 = vmatprep.mubr.bf16.mxu0 0
    %1884 = vmatmul.mubr.bf16.gmra.mrb[0].mxu0 %v1777
    %v1885 = vpop.f32.mrb[0].mxu0
    %v1886 = vadd.f32 0.0, %v1885
    %v1887 = vpop.f32.mrb[0].mxu0
    %v1888 = vpop.f32.mrb[0].mxu0
    %v1889 = vadd.f32 0.0, %v1888
    %v1890 = vpop.f32.mrb[0].mxu0
    %1891 = vdwg.mxu0
    %v1892 = vadd.f32 %v1762, %v1878
    %v1893 = vadd.f32 %v1765, %v1881
    %v1894 = vadd.f32 %v1770, %v1886
    %v1895 = vadd.f32 %v1773, %v1889
    %v1896 = vrot.slane %v1517, 1
    %v1897 = vrot.slane %v1518, 1
    %v1898 = vrot.slane %v1519, 1
    %v1899 = vrot.slane %v1520, 1
    %v1900 = vsel %vm550, %v1898, %v1899
    %v1901 = vsel %vm550, %v1897, %v1898
    %v1902 = vsel %vm550, %v1896, %v1897
    %v1903 = vsel %vm550, %v1899, %v1896
    %v1904 = vsel %vm559, %v1902, 0.0
    %v1905 = vsel %vm560, %v1901, 0.0
    %v1906 = vsel %vm561, %v1900, 0.0
    %v1907 = vsel %vm562, %v1903, 0.0
    %v1908 = vpack.c.bf16 %v1905, %v1904
    %v1909 = vpack.c.bf16 %v1907, %v1906
    %s1910 = scalar_lea.vmem [#allocation8], 192
    %v1911 = vld [vmem:[%s1910] sm:$0xf]
    %v1912 = vld [vmem:[%s1910 + $0x4] sm:$0xf]
    %v1913 = vld [vmem:[%s1910 + $0x8] sm:$0xf]
    %v1914 = vld [vmem:[%s1910 + $0xc] sm:$0xf]
    %v1915 = vld [vmem:[%s1910 + $0x10] sm:$0xf]
    %v1916 = vld [vmem:[%s1910 + $0x14] sm:$0xf]
    %v1917 = vld [vmem:[%s1910 + $0x18] sm:$0xf]
    %v1918 = vld [vmem:[%s1910 + $0x1c] sm:$0xf]
    %v1919 = vld [vmem:[%s1910 + $0x20] sm:$0xf]
    %v1920 = vld [vmem:[%s1910 + $0x24] sm:$0xf]
    %v1921 = vld [vmem:[%s1910 + $0x28] sm:$0xf]
    %v1922 = vld [vmem:[%s1910 + $0x2c] sm:$0xf]
    %v1923 = vld [vmem:[%s1910 + $0x30] sm:$0xf]
    %v1924 = vld [vmem:[%s1910 + $0x34] sm:$0xf]
    %v1925 = vld [vmem:[%s1910 + $0x38] sm:$0xf]
    %v1926 = vld [vmem:[%s1910 + $0x3c] sm:$0xf]
    %v1943 = vunpack.c.l.b16 %v1911
    %v1944 = vunpack.c.l.b16 %v1912
    %v1945 = vunpack.c.l.b16 %v1913
    %v1946 = vunpack.c.l.b16 %v1914
    %v1947 = vunpack.c.l.b16 %v1915
    %v1948 = vunpack.c.l.b16 %v1916
    %v1949 = vunpack.c.l.b16 %v1917
    %v1950 = vunpack.c.l.b16 %v1918
    %v1951 = vunpack.c.l.b16 %v1919
    %v1952 = vunpack.c.l.b16 %v1920
    %v1953 = vunpack.c.l.b16 %v1921
    %v1954 = vunpack.c.l.b16 %v1922
    %v1955 = vunpack.c.l.b16 %v1923
    %v1956 = vunpack.c.l.b16 %v1924
    %v1957 = vunpack.c.l.b16 %v1925
    %v1958 = vunpack.c.l.b16 %v1926
    %v1959 = vpack.c.b16 %v1944, %v1943
    %v1960 = vpack.c.b16 %v1946, %v1945
    %v1961 = vpack.c.b16 %v1948, %v1947
    %v1962 = vpack.c.b16 %v1950, %v1949
    %v1963 = vpack.c.b16 %v1952, %v1951
    %v1964 = vpack.c.b16 %v1954, %v1953
    %v1965 = vpack.c.b16 %v1956, %v1955
    %v1966 = vpack.c.b16 %v1958, %v1957
    %1975 = vmatprep.subr.bf16.mxu0 0
    %1976 = vmatpush1.bf16.msra.mxu0 %v1959
    %1977 = vmatprep.subr.bf16.mxu0 0
    %1978 = vmatpush1.bf16.msra.mxu0 %v1960
    %1979 = vmatprep.subr.bf16.mxu0 0
    %1980 = vmatpush1.bf16.msra.mxu0 %v1961
    %1981 = vmatprep.subr.bf16.mxu0 0
    %1982 = vmatpush1.bf16.msra.mxu0 %v1962
    %1983 = vmatprep.subr.bf16.mxu0 0
    %1984 = vmatpush1.bf16.msra.mxu0 %v1963
    %1985 = vmatprep.subr.bf16.mxu0 0
    %1986 = vmatpush1.bf16.msra.mxu0 %v1964
    %1987 = vmatprep.subr.bf16.mxu0 0
    %1988 = vmatpush1.bf16.msra.mxu0 %v1965
    %1989 = vmatprep.subr.bf16.mxu0 0
    %1990 = vmatpush1.bf16.msra.mxu0 %v1966
    %1991 = vmatprep.subr.bf16.mxu0 0
    %1992 = vmatpush1.bf16.msra.mxu0 0
    %1993 = vmatprep.subr.bf16.mxu0 0
    %1994 = vmatpush1.bf16.msra.mxu0 0
    %1995 = vmatprep.subr.bf16.mxu0 0
    %1996 = vmatpush1.bf16.msra.mxu0 0
    %1997 = vmatprep.subr.bf16.mxu0 0
    %1998 = vmatpush1.bf16.msra.mxu0 0
    %1999 = vmatprep.subr.bf16.mxu0 0
    %2000 = vmatpush1.bf16.msra.mxu0 0
    %2001 = vmatprep.subr.bf16.mxu0 0
    %2002 = vmatpush1.bf16.msra.mxu0 0
    %2003 = vmatprep.subr.bf16.mxu0 0
    %2004 = vmatpush1.bf16.msra.mxu0 0
    %2005 = vmatprep.subr.bf16.mxu0 0
    %2006 = vmatpush1.bf16.msra.mxu0 0
    %2007 = vmatprep.mubr.bf16.mxu0 0
    %2008 = vmatmul.mubr.bf16.gmra.mrb[0].mxu0 %v1908
    %v2009 = vpop.f32.mrb[0].mxu0
    %v2010 = vadd.f32 0.0, %v2009
    %v2011 = vpop.f32.mrb[0].mxu0
    %v2012 = vpop.f32.mrb[0].mxu0
    %v2013 = vadd.f32 0.0, %v2012
    %v2014 = vpop.f32.mrb[0].mxu0
    %2015 = vmatprep.mubr.bf16.mxu0 0
    %2016 = vmatmul.mubr.bf16.gmra.mrb[0].mxu0 %v1909
    %v2017 = vpop.f32.mrb[0].mxu0
    %v2018 = vadd.f32 0.0, %v2017
    %v2019 = vpop.f32.mrb[0].mxu0
    %v2020 = vpop.f32.mrb[0].mxu0
    %v2021 = vadd.f32 0.0, %v2020
    %v2022 = vpop.f32.mrb[0].mxu0
    %2023 = vdwg.mxu0
    %v2024 = vadd.f32 %v1892, %v2010
    %v2025 = vadd.f32 %v1893, %v2013
    %v2026 = vadd.f32 %v1894, %v2018
    %v2027 = vadd.f32 %v1895, %v2021
    %v2028 = vrot.slane %v1517, 2
    %v2029 = vrot.slane %v1518, 2
    %v2030 = vrot.slane %v1519, 2
    %v2031 = vrot.slane %v1520, 2
    %v2032 = vsel %vm691, %v2030, %v2031
    %v2033 = vsel %vm691, %v2029, %v2030
    %v2034 = vsel %vm691, %v2028, %v2029
    %v2035 = vsel %vm691, %v2031, %v2028
    %v2036 = vsel %vm700, %v2034, 0.0
    %v2037 = vsel %vm701, %v2033, 0.0
    %v2038 = vsel %vm702, %v2032, 0.0
    %v2039 = vsel %vm703, %v2035, 0.0
    %v2040 = vpack.c.bf16 %v2037, %v2036
    %v2041 = vpack.c.bf16 %v2039, %v2038
    %s2042 = scalar_lea.vmem [#allocation8], 256
    %v2043 = vld [vmem:[%s2042] sm:$0xf]
    %v2044 = vld [vmem:[%s2042 + $0x4] sm:$0xf]
    %v2045 = vld [vmem:[%s2042 + $0x8] sm:$0xf]
    %v2046 = vld [vmem:[%s2042 + $0xc] sm:$0xf]
    %v2047 = vld [vmem:[%s2042 + $0x10] sm:$0xf]
    %v2048 = vld [vmem:[%s2042 + $0x14] sm:$0xf]
    %v2049 = vld [vmem:[%s2042 + $0x18] sm:$0xf]
    %v2050 = vld [vmem:[%s2042 + $0x1c] sm:$0xf]
    %v2051 = vld [vmem:[%s2042 + $0x20] sm:$0xf]
    %v2052 = vld [vmem:[%s2042 + $0x24] sm:$0xf]
    %v2053 = vld [vmem:[%s2042 + $0x28] sm:$0xf]
    %v2054 = vld [vmem:[%s2042 + $0x2c] sm:$0xf]
    %v2055 = vld [vmem:[%s2042 + $0x30] sm:$0xf]
    %v2056 = vld [vmem:[%s2042 + $0x34] sm:$0xf]
    %v2057 = vld [vmem:[%s2042 + $0x38] sm:$0xf]
    %v2058 = vld [vmem:[%s2042 + $0x3c] sm:$0xf]
    %v2075 = vunpack.c.l.b16 %v2043
    %v2076 = vunpack.c.l.b16 %v2044
    %v2077 = vunpack.c.l.b16 %v2045
    %v2078 = vunpack.c.l.b16 %v2046
    %v2079 = vunpack.c.l.b16 %v2047
    %v2080 = vunpack.c.l.b16 %v2048
    %v2081 = vunpack.c.l.b16 %v2049
    %v2082 = vunpack.c.l.b16 %v2050
    %v2083 = vunpack.c.l.b16 %v2051
    %v2084 = vunpack.c.l.b16 %v2052
    %v2085 = vunpack.c.l.b16 %v2053
    %v2086 = vunpack.c.l.b16 %v2054
    %v2087 = vunpack.c.l.b16 %v2055
    %v2088 = vunpack.c.l.b16 %v2056
    %v2089 = vunpack.c.l.b16 %v2057
    %v2090 = vunpack.c.l.b16 %v2058
    %v2091 = vpack.c.b16 %v2076, %v2075
    %v2092 = vpack.c.b16 %v2078, %v2077
    %v2093 = vpack.c.b16 %v2080, %v2079
    %v2094 = vpack.c.b16 %v2082, %v2081
    %v2095 = vpack.c.b16 %v2084, %v2083
    %v2096 = vpack.c.b16 %v2086, %v2085
    %v2097 = vpack.c.b16 %v2088, %v2087
    %v2098 = vpack.c.b16 %v2090, %v2089
    %2107 = vmatprep.subr.bf16.mxu0 0
    %2108 = vmatpush1.bf16.msra.mxu0 %v2091
    %2109 = vmatprep.subr.bf16.mxu0 0
    %2110 = vmatpush1.bf16.msra.mxu0 %v2092
    %2111 = vmatprep.subr.bf16.mxu0 0
    %2112 = vmatpush1.bf16.msra.mxu0 %v2093
    %2113 = vmatprep.subr.bf16.mxu0 0
    %2114 = vmatpush1.bf16.msra.mxu0 %v2094
    %2115 = vmatprep.subr.bf16.mxu0 0
    %2116 = vmatpush1.bf16.msra.mxu0 %v2095
    %2117 = vmatprep.subr.bf16.mxu0 0
    %2118 = vmatpush1.bf16.msra.mxu0 %v2096
    %2119 = vmatprep.subr.bf16.mxu0 0
    %2120 = vmatpush1.bf16.msra.mxu0 %v2097
    %2121 = vmatprep.subr.bf16.mxu0 0
    %2122 = vmatpush1.bf16.msra.mxu0 %v2098
    %2123 = vmatprep.subr.bf16.mxu0 0
    %2124 = vmatpush1.bf16.msra.mxu0 0
    %2125 = vmatprep.subr.bf16.mxu0 0
    %2126 = vmatpush1.bf16.msra.mxu0 0
    %2127 = vmatprep.subr.bf16.mxu0 0
    %2128 = vmatpush1.bf16.msra.mxu0 0
    %2129 = vmatprep.subr.bf16.mxu0 0
    %2130 = vmatpush1.bf16.msra.mxu0 0
    %2131 = vmatprep.subr.bf16.mxu0 0
    %2132 = vmatpush1.bf16.msra.mxu0 0
    %2133 = vmatprep.subr.bf16.mxu0 0
    %2134 = vmatpush1.bf16.msra.mxu0 0
    %2135 = vmatprep.subr.bf16.mxu0 0
    %2136 = vmatpush1.bf16.msra.mxu0 0
    %2137 = vmatprep.subr.bf16.mxu0 0
    %2138 = vmatpush1.bf16.msra.mxu0 0
    %2139 = vmatprep.mubr.bf16.mxu0 0
    %2140 = vmatmul.mubr.bf16.gmra.mrb[0].mxu0 %v2040
    %v2141 = vpop.f32.mrb[0].mxu0
    %v2142 = vadd.f32 0.0, %v2141
    %v2143 = vpop.f32.mrb[0].mxu0
    %v2144 = vpop.f32.mrb[0].mxu0
    %v2145 = vadd.f32 0.0, %v2144
    %v2146 = vpop.f32.mrb[0].mxu0
    %2147 = vmatprep.mubr.bf16.mxu0 0
    %2148 = vmatmul.mubr.bf16.gmra.mrb[0].mxu0 %v2041
    %v2149 = vpop.f32.mrb[0].mxu0
    %v2150 = vadd.f32 0.0, %v2149
    %v2151 = vpop.f32.mrb[0].mxu0
    %v2152 = vpop.f32.mrb[0].mxu0
    %v2153 = vadd.f32 0.0, %v2152
    %v2154 = vpop.f32.mrb[0].mxu0
    %2155 = vdwg.mxu0
    %v2156 = vadd.f32 %v2024, %v2142
    %v2157 = vadd.f32 %v2025, %v2145
    %v2158 = vadd.f32 %v2026, %v2150
    %v2159 = vadd.f32 %v2027, %v2153
    %s2160 = scalar_lea.vmem %s4, 2
    %v2161 = vld [vmem:[%s2160] sm:$0x1]
    %v2163 = vlaneseq
    %v2164 = vshrl.u32 %v2163, 7
    %v2165 = vsub.s32 0, %v2164
    %v2166 = vrot.slane %v2161, %v2165
    %v2168 = vmul.f32 %v2156, %v2166
    %v2169 = vmul.f32 %v2157, %v2166
    %v2170 = vmul.f32 %v2158, %v2166
    %v2171 = vmul.f32 %v2159, %v2166
    %s2172 = scalar_lea.vmem %s5, 2
    %v2173 = vld [vmem:[%s2172] sm:$0x1]
    %v2175 = vlaneseq
    %v2176 = vshrl.u32 %v2175, 7
    %v2177 = vsub.s32 0, %v2176
    %v2178 = vrot.slane %v2173, %v2177
    %v2180 = vadd.f32 %v2168, %v2178
    %v2181 = vadd.f32 %v2169, %v2178
    %v2182 = vadd.f32 %v2170, %v2178
    %v2183 = vadd.f32 %v2171, %v2178
    %v2184 = vmax.f32 %v2180, 0.0
    %v2185 = vmax.f32 %v2181, 0.0
    %v2186 = vmax.f32 %v2182, 0.0
    %v2187 = vmax.f32 %v2183, 0.0
    %2188 = vst [vmem:[#allocation10] sm:$0xff] %v2184
    %2189 = vst [vmem:[#allocation10 + $0x8] sm:$0xff] %v2185
    %2190 = vst [vmem:[#allocation10 + $0x10] sm:$0xff] %v2186
    %2191 = vst [vmem:[#allocation10 + $0x18] sm:$0xff] %v2187
    // Predicated region
    $region42: #{tpu_custom_call.1} parent=1 // pred_check
      _
    $region43: #{tpu_custom_call.1} parent=1 // pred_check_branch
      %2193 = sbr.rel (0) target = $region45
    $region44: #{tpu_custom_call.1} parent=1 // pred_region
      %s2195 = ssub.s32 512, 512
      %2196 = vsyncadd [#allocation4], %s2195
      %s2197 = sshll.u32 [#allocation10], 4
      %s2198 = int_to_ptr.vmem [resolvable:$true] %s2197
      %2203 = dma.vmem_to_hbm [thread:$0]  %s2198, 512, %s6, [#allocation4], 128, 128, 8
    $region45: #{tpu_custom_call.1} parent=1 // pred_fallthru
      _
    // Predicated region
    $region46: #{tpu_custom_call.1} parent=1 // pred_check
      _
    $region47: #{tpu_custom_call.1} parent=1 // pred_check_branch
      %2205 = sbr.rel (0) target = $region49
    $region48: #{tpu_custom_call.1} parent=1 // pred_region
      %2206 = dma.done [#allocation4], 512
    $region49: #{tpu_custom_call.1} parent=1 // pred_fallthru
      _
    %2207 = vsyncpa [#allocation3], 1
    %2208 = vsyncpa [#allocation6], 1
    %2209 = vsyncpa [#allocation9], 1
    %2210 = vsyncpa [#allocation4], 1

</llo_original>
